<compile_context>
chip_gen: v7x
topology: tpu7x:2x2x1
jax: 0.10.0
libtpu: 0.0.40
codegen_flags: <defaults>
</compile_context>

<pallas_src>
import functools
import math

import jax
import jax.numpy as jnp
from jax.experimental import pallas as pl
from jax.experimental.pallas import tpu as pltpu


_VMEM_LIMIT_BYTES = 64 * 1024 * 1024   # <= physical VMEM per TensorCore on v5e/v6e/v7x


# ----------------------------------------------------------------------------
# helpers
# ----------------------------------------------------------------------------
def _row_grid(M, max_rows=256):
    """Pick a row tile (sublane axis) and grid size for row-independent kernels."""
    tm = M if M <= max_rows else max_rows
    return tm, pl.cdiv(M, tm)


def _layernorm_f32(y, g, b):
    """LayerNorm of an f32 tensor over the last axis (BERT eps = 1e-12)."""
    mu = jnp.mean(y, axis=-1, keepdims=True)
    var = jnp.mean((y - mu) ** 2, axis=-1, keepdims=True)
    return (y - mu) * jax.lax.rsqrt(var + 1e-12) * g + b


# ----------------------------------------------------------------------------
# Pallas kernels
# ----------------------------------------------------------------------------
def _attn_sublayer_kernel(*refs, num_heads, scale, fuse_input_ln):
    """Fused: [optional embedding LN] + QKV proj + multi-head attention
    + single out-proj + residual + LayerNorm.  One batch item per grid step.
    """
    if fuse_input_ln:
        (x_ref, m_ref, wqkv_ref, bqkv_ref, wo_ref, bo_ref, g1_ref, b1_ref,
         gin_ref, bin_ref, o_ref) = refs
    else:
        (x_ref, m_ref, wqkv_ref, bqkv_ref, wo_ref, bo_ref, g1_ref, b1_ref,
         o_ref) = refs
        gin_ref = bin_ref = None

    _, S, H = x_ref.shape
    Dh = H // num_heads

    # Encoder-layer input (also the residual branch).  For layer 0 the embedding
    # LayerNorm is fused here so the f32 embedding sum never round-trips HBM.
    if fuse_input_ln:
        x32 = _layernorm_f32(x_ref[0].astype(jnp.float32), gin_ref[...], bin_ref[...])
    else:
        x32 = x_ref[0].astype(jnp.float32)
    x = x32.astype(jnp.bfloat16)                                      # (S, H) bf16

    # Fused QKV projection: bf16 operands, f32 MXU accumulation, K = H (full depth).
    # Cast to bf16 right away and add the bias in bf16 (no long-lived f32 (S, 3H)).
    qkv = jnp.dot(x, wqkv_ref[...], preferred_element_type=jnp.float32)
    qkv = qkv.astype(jnp.bfloat16) + bqkv_ref[...].astype(jnp.bfloat16)   # (S, 3H)

    # BERT extended attention mask: (1 - mask) * -10000, broadcast over query rows.
    bias = (1.0 - m_ref[0]) * jnp.float32(-10000.0)                   # (1, S)

    # Per-head attention.  Each head's bf16 context is collected and the output
    # projection is done ONCE after the loop (full K = H contraction on the MXU).
    # TODO(synk): for 12-head BERT-base, convert this to lax.fori_loop with pl.ds
    #             head indexing and 128-lane-aligned head pairs (Dh=64) to avoid
    #             per-head relayout copies and code bloat from the static unroll.
    ctx_parts = []
    for h in range(num_heads):
        qh = qkv[:, h * Dh:(h + 1) * Dh]                              # (S, Dh) bf16
        kh = qkv[:, H + h * Dh:H + (h + 1) * Dh]
        vh = qkv[:, 2 * H + h * Dh:2 * H + (h + 1) * Dh]

        s = jax.lax.dot_general(qh, kh, (((1,), (1,)), ((), ())),
                                preferred_element_type=jnp.float32)   # (S, S) f32
        s = s * scale + bias
        s = s - jnp.max(s, axis=-1, keepdims=True)
        p = jnp.exp(s)
        p = p * pl.reciprocal(jnp.sum(p, axis=-1, keepdims=True), approx=True)

        o_h = jnp.dot(p.astype(vh.dtype), vh,
                      preferred_element_type=jnp.float32)             # (S, Dh) f32
        ctx_parts.append(o_h.astype(jnp.bfloat16))

    ctx = jnp.concatenate(ctx_parts, axis=-1)                         # (S, H) bf16

    # Single output projection + residual + LayerNorm (f32 elementwise math).
    y = jnp.dot(ctx, wo_ref[...], preferred_element_type=jnp.float32)
    y = y + bo_ref[...] + x32
    o_ref[0] = _layernorm_f32(y, g1_ref[...], b1_ref[...]).astype(o_ref.dtype)


def _ffn_sublayer_kernel(x_ref, wi_ref, bi_ref, wf_ref, bf_ref, g_ref, b_ref, o_ref):
    """Fused: x@wi + bi -> GELU -> @wf + bf -> +residual -> LayerNorm. Row-tiled."""
    x = x_ref[...]                                                    # (tm, H) bf16
    h1 = jnp.dot(x, wi_ref[...], preferred_element_type=jnp.float32) + bi_ref[...]
    # TODO(synk): HF BertIntermediate uses exact erf-GELU; tanh approximation used here.
    c = math.sqrt(2.0 / math.pi)
    h1 = 0.5 * h1 * (1.0 + jnp.tanh(c * (h1 + 0.044715 * h1 * h1 * h1)))
    h1 = h1.astype(x.dtype)                                           # bf16 for MXU
    y = jnp.dot(h1, wf_ref[...], preferred_element_type=jnp.float32) + bf_ref[...]
    y = y + x.astype(jnp.float32)
    o_ref[...] = _layernorm_f32(y, g_ref[...], b_ref[...]).astype(o_ref.dtype)


def _pooler_head_kernel(cls_ref, wp_ref, bp_ref, wo_ref, bo_ref, o_ref):
    """Fused pooler (tanh) + classification head (padded to 128 lane-dense columns)."""
    pooled = jnp.dot(cls_ref[...], wp_ref[...],
                     preferred_element_type=jnp.float32) + bp_ref[...]
    pooled = jnp.tanh(pooled).astype(cls_ref.dtype)
    # self.drop = nn.Dropout(p=0.3): identity at inference.
    # TODO(synk): training-mode stochastic dropout not implemented.
    logits = jnp.dot(pooled, wo_ref[...],
                     preferred_element_type=jnp.float32) + bo_ref[...]
    o_ref[...] = logits


# ----------------------------------------------------------------------------
# wrappers
# ----------------------------------------------------------------------------
def attention_sublayer(x, mask3d, wqkv, bqkv, wo, bo, gamma, beta, num_heads,
                       input_ln=None):
    B, S, H = x.shape
    scale = 1.0 / math.sqrt(H // num_heads)
    fuse = input_ln is not None
    kern = functools.partial(_attn_sublayer_kernel, num_heads=num_heads,
                             scale=scale, fuse_input_ln=fuse)

    def vec_spec():
        return pl.BlockSpec((1, H), lambda b: (0, 0))

    in_specs = [
        pl.BlockSpec((1, S, H), lambda b: (b, 0, 0)),     # x (f32 for layer 0, bf16 after)
        pl.BlockSpec((1, 1, S), lambda b: (b, 0, 0)),     # mask (per-batch block)
        pl.BlockSpec((H, 3 * H), lambda b: (0, 0)),       # wqkv (fused)
        pl.BlockSpec((1, 3 * H), lambda b: (0, 0)),       # bqkv
        pl.BlockSpec((H, H), lambda b: (0, 0)),           # wo
        vec_spec(),                                       # bo
        vec_spec(),                                       # ln1 gamma
        vec_spec(),                                       # ln1 beta
    ]
    args = [x, mask3d, wqkv, bqkv.reshape(1, 3 * H), wo, bo.reshape(1, H),
            gamma.reshape(1, H), beta.reshape(1, H)]
    if fuse:
        gin, bin_ = input_ln
        in_specs += [vec_spec(), vec_spec()]              # embedding LN gamma/beta
        args += [gin.reshape(1, H), bin_.reshape(1, H)]

    # TODO(synk): for v7x dual-TensorCore balance at small B, add a parallel query-tile
    #             grid axis (grid=(B, S//tq)); neutral on v5e/v6e so kept at (B,).
    return pl.pallas_call(
        kern,
        grid=(B,),
        in_specs=in_specs,
        out_specs=pl.BlockSpec((1, S, H), lambda b: (b, 0, 0)),
        out_shape=jax.ShapeDtypeStruct((B, S, H), jnp.bfloat16),
        compiler_params=pltpu.CompilerParams(
            dimension_semantics=("parallel",),
            vmem_limit_bytes=_VMEM_LIMIT_BYTES),
    )(*args)


def ffn_sublayer(x2d, wi, bi, wf, bfc, gamma, beta):
    M, H = x2d.shape
    I = wi.shape[1]
    tm, gm = _row_grid(M)
    return pl.pallas_call(
        _ffn_sublayer_kernel,
        grid=(gm,),
        in_specs=[
            pl.BlockSpec((tm, H), lambda i: (i, 0)),
            pl.BlockSpec((H, I), lambda i: (0, 0)),
            pl.BlockSpec((1, I), lambda i: (0, 0)),
            pl.BlockSpec((I, H), lambda i: (0, 0)),
            pl.BlockSpec((1, H), lambda i: (0, 0)),
            pl.BlockSpec((1, H), lambda i: (0, 0)),
            pl.BlockSpec((1, H), lambda i: (0, 0)),
        ],
        out_specs=pl.BlockSpec((tm, H), lambda i: (i, 0)),
        out_shape=jax.ShapeDtypeStruct((M, H), x2d.dtype),
        compiler_params=pltpu.CompilerParams(
            dimension_semantics=("parallel",),
            vmem_limit_bytes=_VMEM_LIMIT_BYTES),
    )(x2d, wi, bi.reshape(1, I), wf, bfc.reshape(1, H),
      gamma.reshape(1, H), beta.reshape(1, H))


def pooler_and_head(cls_tokens, wp, bp, out_w_pad, out_b_pad, n_classes):
    B, H = cls_tokens.shape
    NPAD = out_w_pad.shape[1]
    logits_pad = pl.pallas_call(
        _pooler_head_kernel,
        out_shape=jax.ShapeDtypeStruct((B, NPAD), jnp.float32),
    )(cls_tokens, wp, bp.reshape(1, H), out_w_pad, out_b_pad.reshape(1, NPAD))
    return logits_pad[:, :n_classes]


# ----------------------------------------------------------------------------
# Model (glue in plain JAX, hot paths in the fused Pallas kernels above)
# ----------------------------------------------------------------------------
def init_params(key, *, vocab=100, hidden=32, heads=4, n_layers=2,
                inter=64, max_pos=16, n_classes=3):
    assert hidden % heads == 0
    keys = iter(jax.random.split(key, 64))

    def w(shape, scale=0.02, dtype=jnp.bfloat16):
        return (scale * jax.random.normal(next(keys), shape)).astype(dtype)

    def zeros(shape, dtype=jnp.float32):
        return jnp.zeros(shape, dtype)

    def ones(shape):
        return jnp.ones(shape, jnp.float32)

    out_w = w((hidden, n_classes))
    out_w_pad = jnp.zeros((hidden, 128), jnp.bfloat16).at[:, :n_classes].set(out_w)

    params = {
        "config": {"hidden": hidden, "heads": heads, "n_classes": n_classes},
        "embeddings": {
            "word": w((vocab, hidden), dtype=jnp.float32),
            "pos": w((max_pos, hidden), dtype=jnp.float32),
            "type": w((2, hidden), dtype=jnp.float32),
            "ln_g": ones((hidden,)),
            "ln_b": zeros((hidden,)),
        },
        "layers": [],
        "pooler_w": w((hidden, hidden)),
        "pooler_b": zeros((hidden,)),
        "out_w_pad": out_w_pad,               # lane-dense padded head
        "out_b_pad": zeros((128,)),
    }
    for _ in range(n_layers):
        wq, wk, wv = w((hidden, hidden)), w((hidden, hidden)), w((hidden, hidden))
        params["layers"].append({
            "wqkv": jnp.concatenate([wq, wk, wv], axis=1),     # fused (H, 3H)
            "bqkv": zeros((3 * hidden,)),
            "wo": w((hidden, hidden)), "bo": zeros((hidden,)),
            "ln1_g": ones((hidden,)), "ln1_b": zeros((hidden,)),
            "wi": w((hidden, inter)), "bi": zeros((inter,)),
            "wf": w((inter, hidden)), "bf": zeros((hidden,)),
            "ln2_g": ones((hidden,)), "ln2_b": zeros((hidden,)),
        })
    return params


def sentiment_classifier_forward(params, input_ids, attention_mask):
    cfg = params["config"]
    B, S = input_ids.shape
    H, nH = cfg["hidden"], cfg["heads"]

    # --- BERT embeddings (gathers are XLA glue). The embedding LayerNorm is fused into
    #     the first attention sublayer, so the f32 sum never round-trips HBM. ---
    emb = params["embeddings"]
    x = (emb["word"][input_ids]
         + emb["pos"][jnp.arange(S)][None, :, :]
         + emb["type"][0][None, None, :])                            # (B, S, H) f32

    mask3d = attention_mask.astype(jnp.float32).reshape(B, 1, S)

    if not params["layers"]:
        # TODO(synk): zero-encoder-layer fallback only (not used here); plain-JAX LN.
        x = _layernorm_f32(x, emb["ln_g"], emb["ln_b"]).astype(jnp.bfloat16)

    # --- BERT encoder layers: 2 fused pallas_calls per layer ---
    for li, lyr in enumerate(params["layers"]):
        input_ln = (emb["ln_g"], emb["ln_b"]) if li == 0 else None
        x = attention_sublayer(x, mask3d, lyr["wqkv"], lyr["bqkv"],
                               lyr["wo"], lyr["bo"], lyr["ln1_g"], lyr["ln1_b"], nH,
                               input_ln=input_ln)
        x = ffn_sublayer(x.reshape(B * S, H), lyr["wi"], lyr["bi"],
                         lyr["wf"], lyr["bf"], lyr["ln2_g"], lyr["ln2_b"]
                         ).reshape(B, S, H)

    # --- pooler (tanh on [CLS]) + dropout(identity, eval) + classification head ---
    cls = x[:, 0, :]                                                  # (B, H) bf16
    logits = pooler_and_head(cls, params["pooler_w"], params["pooler_b"],
                             params["out_w_pad"], params["out_b_pad"],
                             cfg["n_classes"])
    return logits


if __name__ == "__main__":
    key = jax.random.PRNGKey(0)
    k_params, k_ids = jax.random.split(key)

    B, S, VOCAB, N_CLASSES = 2, 8, 100, 3
    params = init_params(k_params, vocab=VOCAB, hidden=32, heads=4,
                         n_layers=2, inter=64, max_pos=16, n_classes=N_CLASSES)

    input_ids = jax.random.randint(k_ids, (B, S), 0, VOCAB, dtype=jnp.int32)
    attention_mask = jnp.array(
        [[1, 1, 1, 1, 1, 1, 1, 1],
         [1, 1, 1, 1, 1, 0, 0, 0]], dtype=jnp.int32)                  # second seq padded

    logits = sentiment_classifier_forward(params, input_ids, attention_mask)
    logits = jax.block_until_ready(logits)
    assert logits.shape == (B, N_CLASSES)
    assert bool(jnp.all(jnp.isfinite(logits)))
    print("KERNEL_OK")
</pallas_src>

<mosaic_0001>
module attributes {stable_mosaic.version = 11 : i64} {
  func.func @_attn_sublayer_kernel(%arg0: i32, %arg1: memref<1x8x32xf32, #tpu.memory_space<vmem>>, %arg2: memref<1x1x8xf32, #tpu.memory_space<vmem>>, %arg3: memref<32x96xbf16, #tpu.memory_space<vmem>>, %arg4: memref<1x96xf32, #tpu.memory_space<vmem>>, %arg5: memref<32x32xbf16, #tpu.memory_space<vmem>>, %arg6: memref<1x32xf32, #tpu.memory_space<vmem>>, %arg7: memref<1x32xf32, #tpu.memory_space<vmem>>, %arg8: memref<1x32xf32, #tpu.memory_space<vmem>>, %arg9: memref<1x32xf32, #tpu.memory_space<vmem>>, %arg10: memref<1x32xf32, #tpu.memory_space<vmem>>, %arg11: memref<1x8x32xbf16, #tpu.memory_space<vmem>>) attributes {dimension_semantics = [#tpu.dimension_semantics<parallel>], iteration_bounds = array<i64: 2>, scalar_prefetch = 0 : i64, scratch_operands = 0 : i64, tpu.core_type = #tpu.core_type<tc>, window_params = [{transform_indices = @transform_0, window_bounds = array<i64: 1, 8, 32>}, {transform_indices = @transform_1, window_bounds = array<i64: 1, 1, 8>}, {pipeline_mode = #tpu.pipeline_mode<synchronous>, transform_indices = @transform_2, window_bounds = array<i64: 32, 96>}, {pipeline_mode = #tpu.pipeline_mode<synchronous>, transform_indices = @transform_3, window_bounds = array<i64: 1, 96>}, {pipeline_mode = #tpu.pipeline_mode<synchronous>, transform_indices = @transform_4, window_bounds = array<i64: 32, 32>}, {pipeline_mode = #tpu.pipeline_mode<synchronous>, transform_indices = @transform_5, window_bounds = array<i64: 1, 32>}, {pipeline_mode = #tpu.pipeline_mode<synchronous>, transform_indices = @transform_6, window_bounds = array<i64: 1, 32>}, {pipeline_mode = #tpu.pipeline_mode<synchronous>, transform_indices = @transform_7, window_bounds = array<i64: 1, 32>}, {pipeline_mode = #tpu.pipeline_mode<synchronous>, transform_indices = @transform_8, window_bounds = array<i64: 1, 32>}, {pipeline_mode = #tpu.pipeline_mode<synchronous>, transform_indices = @transform_9, window_bounds = array<i64: 1, 32>}, {transform_indices = @transform_10, window_bounds = array<i64: 1, 8, 32>}]} {
    %c0 = arith.constant 0 : index
    %c0_0 = arith.constant 0 : index
    %c0_1 = arith.constant 0 : index
    %0 = vector.load %arg1[%c0, %c0_0, %c0_1] : memref<1x8x32xf32, #tpu.memory_space<vmem>>, vector<1x8x32xf32>
    %1 = vector.shape_cast %0 : vector<1x8x32xf32> to vector<8x32xf32>
    %c0_2 = arith.constant 0 : index
    %c0_3 = arith.constant 0 : index
    %2 = vector.load %arg9[%c0_2, %c0_3] : memref<1x32xf32, #tpu.memory_space<vmem>>, vector<1x32xf32>
    %c0_4 = arith.constant 0 : index
    %c0_5 = arith.constant 0 : index
    %3 = vector.load %arg10[%c0_4, %c0_5] : memref<1x32xf32, #tpu.memory_space<vmem>>, vector<1x32xf32>
    %cst = arith.constant dense<0.000000e+00> : vector<8xf32>
    %4 = vector.multi_reduction <add>, %1, %cst [1] : vector<8x32xf32> to vector<8xf32>
    %5 = vector.shape_cast %4 : vector<8xf32> to vector<8x1xf32>
    %cst_6 = arith.constant 3.200000e+01 : f32
    %6 = vector.broadcast %cst_6 : f32 to vector<8x1xf32>
    %7 = arith.divf %5, %6 : vector<8x1xf32>
    %8 = vector.broadcast %7 : vector<8x1xf32> to vector<8x32xf32>
    %9 = arith.subf %1, %8 : vector<8x32xf32>
    %10 = arith.mulf %9, %9 : vector<8x32xf32>
    %cst_7 = arith.constant dense<0.000000e+00> : vector<8xf32>
    %11 = vector.multi_reduction <add>, %10, %cst_7 [1] : vector<8x32xf32> to vector<8xf32>
    %12 = vector.shape_cast %11 : vector<8xf32> to vector<8x1xf32>
    %cst_8 = arith.constant 3.200000e+01 : f32
    %13 = vector.broadcast %cst_8 : f32 to vector<8x1xf32>
    %14 = arith.divf %12, %13 : vector<8x1xf32>
    %15 = vector.broadcast %7 : vector<8x1xf32> to vector<8x32xf32>
    %16 = arith.subf %1, %15 : vector<8x32xf32>
    %cst_9 = arith.constant 9.99999996E-13 : f32
    %17 = vector.broadcast %cst_9 : f32 to vector<8x1xf32>
    %18 = arith.addf %14, %17 : vector<8x1xf32>
    %19 = math.rsqrt %18 : vector<8x1xf32>
    %20 = vector.broadcast %19 : vector<8x1xf32> to vector<8x32xf32>
    %21 = arith.mulf %16, %20 : vector<8x32xf32>
    %22 = vector.broadcast %2 : vector<1x32xf32> to vector<8x32xf32>
    %23 = arith.mulf %21, %22 : vector<8x32xf32>
    %24 = vector.broadcast %3 : vector<1x32xf32> to vector<8x32xf32>
    %25 = arith.addf %23, %24 : vector<8x32xf32>
    %26 = arith.truncf %25 : vector<8x32xf32> to vector<8x32xbf16>
    %c0_10 = arith.constant 0 : index
    %c0_11 = arith.constant 0 : index
    %27 = vector.load %arg3[%c0_10, %c0_11] : memref<32x96xbf16, #tpu.memory_space<vmem>>, vector<32x96xbf16>
    %cst_12 = arith.constant dense<0.000000e+00> : vector<8x96xf32>
    %28 = tpu.matmul %26, %27, %cst_12 {dimension_numbers = #tpu.dot_dimension_numbers<[1], [0], [0], [1], [0, 0, 1, 1], [], []>} : vector<8x32xbf16>, vector<32x96xbf16>, vector<8x96xf32> -> vector<8x96xf32>
    %29 = arith.truncf %28 : vector<8x96xf32> to vector<8x96xbf16>
    %c0_13 = arith.constant 0 : index
    %c0_14 = arith.constant 0 : index
    %30 = vector.load %arg4[%c0_13, %c0_14] : memref<1x96xf32, #tpu.memory_space<vmem>>, vector<1x96xf32>
    %31 = arith.truncf %30 : vector<1x96xf32> to vector<1x96xbf16>
    %32 = vector.broadcast %31 : vector<1x96xbf16> to vector<8x96xbf16>
    %33 = arith.addf %29, %32 : vector<8x96xbf16>
    %c0_15 = arith.constant 0 : index
    %c0_16 = arith.constant 0 : index
    %c0_17 = arith.constant 0 : index
    %34 = vector.load %arg2[%c0_15, %c0_16, %c0_17] : memref<1x1x8xf32, #tpu.memory_space<vmem>>, vector<1x1x8xf32>
    %35 = vector.shape_cast %34 : vector<1x1x8xf32> to vector<1x8xf32>
    %cst_18 = arith.constant 1.000000e+00 : f32
    %36 = vector.broadcast %cst_18 : f32 to vector<1x8xf32>
    %37 = arith.subf %36, %35 : vector<1x8xf32>
    %cst_19 = arith.constant -1.000000e+04 : f32
    %38 = vector.broadcast %cst_19 : f32 to vector<1x8xf32>
    %39 = arith.mulf %37, %38 : vector<1x8xf32>
    %40 = vector.extract_strided_slice %33 {offsets = [0, 0], sizes = [8, 8], strides = [1, 1]} : vector<8x96xbf16> to vector<8x8xbf16>
    %41 = vector.extract_strided_slice %33 {offsets = [0, 32], sizes = [8, 8], strides = [1, 1]} : vector<8x96xbf16> to vector<8x8xbf16>
    %42 = vector.extract_strided_slice %33 {offsets = [0, 64], sizes = [8, 8], strides = [1, 1]} : vector<8x96xbf16> to vector<8x8xbf16>
    %cst_20 = arith.constant dense<0.000000e+00> : vector<8x8xf32>
    %43 = tpu.matmul %40, %41, %cst_20 {dimension_numbers = #tpu.dot_dimension_numbers<[1], [1], [0], [0], [0, 0, 1, 0], [], []>} : vector<8x8xbf16>, vector<8x8xbf16>, vector<8x8xf32> -> vector<8x8xf32>
    %cst_21 = arith.constant 0.353553385 : f32
    %44 = vector.broadcast %cst_21 : f32 to vector<8x8xf32>
    %45 = arith.mulf %43, %44 : vector<8x8xf32>
    %46 = vector.broadcast %39 : vector<1x8xf32> to vector<8x8xf32>
    %47 = arith.addf %45, %46 : vector<8x8xf32>
    %cst_22 = arith.constant dense<0xFF800000> : vector<8xf32>
    %48 = vector.multi_reduction <maximumf>, %47, %cst_22 [1] : vector<8x8xf32> to vector<8xf32>
    %49 = vector.shape_cast %48 : vector<8xf32> to vector<8x1xf32>
    %50 = vector.broadcast %49 : vector<8x1xf32> to vector<8x8xf32>
    %51 = arith.subf %47, %50 : vector<8x8xf32>
    %52 = math.exp %51 : vector<8x8xf32>
    %cst_23 = arith.constant dense<0.000000e+00> : vector<8xf32>
    %53 = vector.multi_reduction <add>, %52, %cst_23 [1] : vector<8x8xf32> to vector<8xf32>
    %54 = vector.shape_cast %53 : vector<8xf32> to vector<8x1xf32>
    %55 = tpu.reciprocal %54 {approx = true} : vector<8x1xf32> -> vector<8x1xf32>
    %56 = vector.broadcast %55 : vector<8x1xf32> to vector<8x8xf32>
    %57 = arith.mulf %52, %56 : vector<8x8xf32>
    %58 = arith.truncf %57 : vector<8x8xf32> to vector<8x8xbf16>
    %cst_24 = arith.constant dense<0.000000e+00> : vector<8x8xf32>
    %59 = tpu.matmul %58, %42, %cst_24 {dimension_numbers = #tpu.dot_dimension_numbers<[1], [0], [0], [1], [0, 0, 1, 1], [], []>} : vector<8x8xbf16>, vector<8x8xbf16>, vector<8x8xf32> -> vector<8x8xf32>
    %60 = arith.truncf %59 : vector<8x8xf32> to vector<8x8xbf16>
    %61 = vector.extract_strided_slice %33 {offsets = [0, 8], sizes = [8, 8], strides = [1, 1]} : vector<8x96xbf16> to vector<8x8xbf16>
    %62 = vector.extract_strided_slice %33 {offsets = [0, 40], sizes = [8, 8], strides = [1, 1]} : vector<8x96xbf16> to vector<8x8xbf16>
    %63 = vector.extract_strided_slice %33 {offsets = [0, 72], sizes = [8, 8], strides = [1, 1]} : vector<8x96xbf16> to vector<8x8xbf16>
    %cst_25 = arith.constant dense<0.000000e+00> : vector<8x8xf32>
    %64 = tpu.matmul %61, %62, %cst_25 {dimension_numbers = #tpu.dot_dimension_numbers<[1], [1], [0], [0], [0, 0, 1, 0], [], []>} : vector<8x8xbf16>, vector<8x8xbf16>, vector<8x8xf32> -> vector<8x8xf32>
    %cst_26 = arith.constant 0.353553385 : f32
    %65 = vector.broadcast %cst_26 : f32 to vector<8x8xf32>
    %66 = arith.mulf %64, %65 : vector<8x8xf32>
    %67 = vector.broadcast %39 : vector<1x8xf32> to vector<8x8xf32>
    %68 = arith.addf %66, %67 : vector<8x8xf32>
    %cst_27 = arith.constant dense<0xFF800000> : vector<8xf32>
    %69 = vector.multi_reduction <maximumf>, %68, %cst_27 [1] : vector<8x8xf32> to vector<8xf32>
    %70 = vector.shape_cast %69 : vector<8xf32> to vector<8x1xf32>
    %71 = vector.broadcast %70 : vector<8x1xf32> to vector<8x8xf32>
    %72 = arith.subf %68, %71 : vector<8x8xf32>
    %73 = math.exp %72 : vector<8x8xf32>
    %cst_28 = arith.constant dense<0.000000e+00> : vector<8xf32>
    %74 = vector.multi_reduction <add>, %73, %cst_28 [1] : vector<8x8xf32> to vector<8xf32>
    %75 = vector.shape_cast %74 : vector<8xf32> to vector<8x1xf32>
    %76 = tpu.reciprocal %75 {approx = true} : vector<8x1xf32> -> vector<8x1xf32>
    %77 = vector.broadcast %76 : vector<8x1xf32> to vector<8x8xf32>
    %78 = arith.mulf %73, %77 : vector<8x8xf32>
    %79 = arith.truncf %78 : vector<8x8xf32> to vector<8x8xbf16>
    %cst_29 = arith.constant dense<0.000000e+00> : vector<8x8xf32>
    %80 = tpu.matmul %79, %63, %cst_29 {dimension_numbers = #tpu.dot_dimension_numbers<[1], [0], [0], [1], [0, 0, 1, 1], [], []>} : vector<8x8xbf16>, vector<8x8xbf16>, vector<8x8xf32> -> vector<8x8xf32>
    %81 = arith.truncf %80 : vector<8x8xf32> to vector<8x8xbf16>
    %82 = vector.extract_strided_slice %33 {offsets = [0, 16], sizes = [8, 8], strides = [1, 1]} : vector<8x96xbf16> to vector<8x8xbf16>
    %83 = vector.extract_strided_slice %33 {offsets = [0, 48], sizes = [8, 8], strides = [1, 1]} : vector<8x96xbf16> to vector<8x8xbf16>
    %84 = vector.extract_strided_slice %33 {offsets = [0, 80], sizes = [8, 8], strides = [1, 1]} : vector<8x96xbf16> to vector<8x8xbf16>
    %cst_30 = arith.constant dense<0.000000e+00> : vector<8x8xf32>
    %85 = tpu.matmul %82, %83, %cst_30 {dimension_numbers = #tpu.dot_dimension_numbers<[1], [1], [0], [0], [0, 0, 1, 0], [], []>} : vector<8x8xbf16>, vector<8x8xbf16>, vector<8x8xf32> -> vector<8x8xf32>
    %cst_31 = arith.constant 0.353553385 : f32
    %86 = vector.broadcast %cst_31 : f32 to vector<8x8xf32>
    %87 = arith.mulf %85, %86 : vector<8x8xf32>
    %88 = vector.broadcast %39 : vector<1x8xf32> to vector<8x8xf32>
    %89 = arith.addf %87, %88 : vector<8x8xf32>
    %cst_32 = arith.constant dense<0xFF800000> : vector<8xf32>
    %90 = vector.multi_reduction <maximumf>, %89, %cst_32 [1] : vector<8x8xf32> to vector<8xf32>
    %91 = vector.shape_cast %90 : vector<8xf32> to vector<8x1xf32>
    %92 = vector.broadcast %91 : vector<8x1xf32> to vector<8x8xf32>
    %93 = arith.subf %89, %92 : vector<8x8xf32>
    %94 = math.exp %93 : vector<8x8xf32>
    %cst_33 = arith.constant dense<0.000000e+00> : vector<8xf32>
    %95 = vector.multi_reduction <add>, %94, %cst_33 [1] : vector<8x8xf32> to vector<8xf32>
    %96 = vector.shape_cast %95 : vector<8xf32> to vector<8x1xf32>
    %97 = tpu.reciprocal %96 {approx = true} : vector<8x1xf32> -> vector<8x1xf32>
    %98 = vector.broadcast %97 : vector<8x1xf32> to vector<8x8xf32>
    %99 = arith.mulf %94, %98 : vector<8x8xf32>
    %100 = arith.truncf %99 : vector<8x8xf32> to vector<8x8xbf16>
    %cst_34 = arith.constant dense<0.000000e+00> : vector<8x8xf32>
    %101 = tpu.matmul %100, %84, %cst_34 {dimension_numbers = #tpu.dot_dimension_numbers<[1], [0], [0], [1], [0, 0, 1, 1], [], []>} : vector<8x8xbf16>, vector<8x8xbf16>, vector<8x8xf32> -> vector<8x8xf32>
    %102 = arith.truncf %101 : vector<8x8xf32> to vector<8x8xbf16>
    %103 = vector.extract_strided_slice %33 {offsets = [0, 24], sizes = [8, 8], strides = [1, 1]} : vector<8x96xbf16> to vector<8x8xbf16>
    %104 = vector.extract_strided_slice %33 {offsets = [0, 56], sizes = [8, 8], strides = [1, 1]} : vector<8x96xbf16> to vector<8x8xbf16>
    %105 = vector.extract_strided_slice %33 {offsets = [0, 88], sizes = [8, 8], strides = [1, 1]} : vector<8x96xbf16> to vector<8x8xbf16>
    %cst_35 = arith.constant dense<0.000000e+00> : vector<8x8xf32>
    %106 = tpu.matmul %103, %104, %cst_35 {dimension_numbers = #tpu.dot_dimension_numbers<[1], [1], [0], [0], [0, 0, 1, 0], [], []>} : vector<8x8xbf16>, vector<8x8xbf16>, vector<8x8xf32> -> vector<8x8xf32>
    %cst_36 = arith.constant 0.353553385 : f32
    %107 = vector.broadcast %cst_36 : f32 to vector<8x8xf32>
    %108 = arith.mulf %106, %107 : vector<8x8xf32>
    %109 = vector.broadcast %39 : vector<1x8xf32> to vector<8x8xf32>
    %110 = arith.addf %108, %109 : vector<8x8xf32>
    %cst_37 = arith.constant dense<0xFF800000> : vector<8xf32>
    %111 = vector.multi_reduction <maximumf>, %110, %cst_37 [1] : vector<8x8xf32> to vector<8xf32>
    %112 = vector.shape_cast %111 : vector<8xf32> to vector<8x1xf32>
    %113 = vector.broadcast %112 : vector<8x1xf32> to vector<8x8xf32>
    %114 = arith.subf %110, %113 : vector<8x8xf32>
    %115 = math.exp %114 : vector<8x8xf32>
    %cst_38 = arith.constant dense<0.000000e+00> : vector<8xf32>
    %116 = vector.multi_reduction <add>, %115, %cst_38 [1] : vector<8x8xf32> to vector<8xf32>
    %117 = vector.shape_cast %116 : vector<8xf32> to vector<8x1xf32>
    %118 = tpu.reciprocal %117 {approx = true} : vector<8x1xf32> -> vector<8x1xf32>
    %119 = vector.broadcast %118 : vector<8x1xf32> to vector<8x8xf32>
    %120 = arith.mulf %115, %119 : vector<8x8xf32>
    %121 = arith.truncf %120 : vector<8x8xf32> to vector<8x8xbf16>
    %cst_39 = arith.constant dense<0.000000e+00> : vector<8x8xf32>
    %122 = tpu.matmul %121, %105, %cst_39 {dimension_numbers = #tpu.dot_dimension_numbers<[1], [0], [0], [1], [0, 0, 1, 1], [], []>} : vector<8x8xbf16>, vector<8x8xbf16>, vector<8x8xf32> -> vector<8x8xf32>
    %123 = arith.truncf %122 : vector<8x8xf32> to vector<8x8xbf16>
    %124 = tpu.concatenate %60, %81, %102, %123 in 1 : vector<8x8xbf16>, vector<8x8xbf16>, vector<8x8xbf16>, vector<8x8xbf16> -> vector<8x32xbf16>
    %c0_40 = arith.constant 0 : index
    %c0_41 = arith.constant 0 : index
    %125 = vector.load %arg5[%c0_40, %c0_41] : memref<32x32xbf16, #tpu.memory_space<vmem>>, vector<32x32xbf16>
    %cst_42 = arith.constant dense<0.000000e+00> : vector<8x32xf32>
    %126 = tpu.matmul %124, %125, %cst_42 {dimension_numbers = #tpu.dot_dimension_numbers<[1], [0], [0], [1], [0, 0, 1, 1], [], []>} : vector<8x32xbf16>, vector<32x32xbf16>, vector<8x32xf32> -> vector<8x32xf32>
    %c0_43 = arith.constant 0 : index
    %c0_44 = arith.constant 0 : index
    %127 = vector.load %arg6[%c0_43, %c0_44] : memref<1x32xf32, #tpu.memory_space<vmem>>, vector<1x32xf32>
    %128 = vector.broadcast %127 : vector<1x32xf32> to vector<8x32xf32>
    %129 = arith.addf %126, %128 : vector<8x32xf32>
    %130 = arith.addf %129, %25 : vector<8x32xf32>
    %c0_45 = arith.constant 0 : index
    %c0_46 = arith.constant 0 : index
    %131 = vector.load %arg7[%c0_45, %c0_46] : memref<1x32xf32, #tpu.memory_space<vmem>>, vector<1x32xf32>
    %c0_47 = arith.constant 0 : index
    %c0_48 = arith.constant 0 : index
    %132 = vector.load %arg8[%c0_47, %c0_48] : memref<1x32xf32, #tpu.memory_space<vmem>>, vector<1x32xf32>
    %cst_49 = arith.constant dense<0.000000e+00> : vector<8xf32>
    %133 = vector.multi_reduction <add>, %130, %cst_49 [1] : vector<8x32xf32> to vector<8xf32>
    %134 = vector.shape_cast %133 : vector<8xf32> to vector<8x1xf32>
    %cst_50 = arith.constant 3.200000e+01 : f32
    %135 = vector.broadcast %cst_50 : f32 to vector<8x1xf32>
    %136 = arith.divf %134, %135 : vector<8x1xf32>
    %137 = vector.broadcast %136 : vector<8x1xf32> to vector<8x32xf32>
    %138 = arith.subf %130, %137 : vector<8x32xf32>
    %139 = arith.mulf %138, %138 : vector<8x32xf32>
    %cst_51 = arith.constant dense<0.000000e+00> : vector<8xf32>
    %140 = vector.multi_reduction <add>, %139, %cst_51 [1] : vector<8x32xf32> to vector<8xf32>
    %141 = vector.shape_cast %140 : vector<8xf32> to vector<8x1xf32>
    %cst_52 = arith.constant 3.200000e+01 : f32
    %142 = vector.broadcast %cst_52 : f32 to vector<8x1xf32>
    %143 = arith.divf %141, %142 : vector<8x1xf32>
    %144 = vector.broadcast %136 : vector<8x1xf32> to vector<8x32xf32>
    %145 = arith.subf %130, %144 : vector<8x32xf32>
    %cst_53 = arith.constant 9.99999996E-13 : f32
    %146 = vector.broadcast %cst_53 : f32 to vector<8x1xf32>
    %147 = arith.addf %143, %146 : vector<8x1xf32>
    %148 = math.rsqrt %147 : vector<8x1xf32>
    %149 = vector.broadcast %148 : vector<8x1xf32> to vector<8x32xf32>
    %150 = arith.mulf %145, %149 : vector<8x32xf32>
    %151 = vector.broadcast %131 : vector<1x32xf32> to vector<8x32xf32>
    %152 = arith.mulf %150, %151 : vector<8x32xf32>
    %153 = vector.broadcast %132 : vector<1x32xf32> to vector<8x32xf32>
    %154 = arith.addf %152, %153 : vector<8x32xf32>
    %155 = arith.truncf %154 : vector<8x32xf32> to vector<8x32xbf16>
    %c0_54 = arith.constant 0 : index
    %c0_55 = arith.constant 0 : index
    %c0_56 = arith.constant 0 : index
    %156 = vector.load %arg11[%c0_54, %c0_55, %c0_56] : memref<1x8x32xbf16, #tpu.memory_space<vmem>>, vector<1x8x32xbf16>
    %157 = vector.shape_cast %156 : vector<1x8x32xbf16> to vector<8x32xbf16>
    %158 = vector.shape_cast %155 : vector<8x32xbf16> to vector<1x8x32xbf16>
    tpu.vector_store %arg11[%c0_54, %c0_55, %c0_56], %158 {strides = array<i32>} : memref<1x8x32xbf16, #tpu.memory_space<vmem>>, vector<1x8x32xbf16>,
    return
  }
  func.func @transform_0(%arg0: i32) -> (i32, i32, i32) {
    %c0_i32 = arith.constant 0 : i32
    %c0_i32_0 = arith.constant 0 : i32
    %c0_i32_1 = arith.constant 0 : i32
    return %arg0, %c0_i32, %c0_i32_0 : i32, i32, i32
  }
  func.func @transform_1(%arg0: i32) -> (i32, i32, i32) {
    %c0_i32 = arith.constant 0 : i32
    %c0_i32_0 = arith.constant 0 : i32
    %c0_i32_1 = arith.constant 0 : i32
    return %arg0, %c0_i32, %c0_i32_0 : i32, i32, i32
  }
  func.func @transform_2(%arg0: i32) -> (i32, i32) {
    %c0_i32 = arith.constant 0 : i32
    %c0_i32_0 = arith.constant 0 : i32
    %c0_i32_1 = arith.constant 0 : i32
    return %c0_i32, %c0_i32_0 : i32, i32
  }
  func.func @transform_3(%arg0: i32) -> (i32, i32) {
    %c0_i32 = arith.constant 0 : i32
    %c0_i32_0 = arith.constant 0 : i32
    %c0_i32_1 = arith.constant 0 : i32
    return %c0_i32, %c0_i32_0 : i32, i32
  }
  func.func @transform_4(%arg0: i32) -> (i32, i32) {
    %c0_i32 = arith.constant 0 : i32
    %c0_i32_0 = arith.constant 0 : i32
    %c0_i32_1 = arith.constant 0 : i32
    return %c0_i32, %c0_i32_0 : i32, i32
  }
  func.func @transform_5(%arg0: i32) -> (i32, i32) {
    %c0_i32 = arith.constant 0 : i32
    %c0_i32_0 = arith.constant 0 : i32
    %c0_i32_1 = arith.constant 0 : i32
    return %c0_i32, %c0_i32_0 : i32, i32
  }
  func.func @transform_6(%arg0: i32) -> (i32, i32) {
    %c0_i32 = arith.constant 0 : i32
    %c0_i32_0 = arith.constant 0 : i32
    %c0_i32_1 = arith.constant 0 : i32
    return %c0_i32, %c0_i32_0 : i32, i32
  }
  func.func @transform_7(%arg0: i32) -> (i32, i32) {
    %c0_i32 = arith.constant 0 : i32
    %c0_i32_0 = arith.constant 0 : i32
    %c0_i32_1 = arith.constant 0 : i32
    return %c0_i32, %c0_i32_0 : i32, i32
  }
  func.func @transform_8(%arg0: i32) -> (i32, i32) {
    %c0_i32 = arith.constant 0 : i32
    %c0_i32_0 = arith.constant 0 : i32
    %c0_i32_1 = arith.constant 0 : i32
    return %c0_i32, %c0_i32_0 : i32, i32
  }
  func.func @transform_9(%arg0: i32) -> (i32, i32) {
    %c0_i32 = arith.constant 0 : i32
    %c0_i32_0 = arith.constant 0 : i32
    %c0_i32_1 = arith.constant 0 : i32
    return %c0_i32, %c0_i32_0 : i32, i32
  }
  func.func @transform_10(%arg0: i32) -> (i32, i32, i32) {
    %c0_i32 = arith.constant 0 : i32
    %c0_i32_0 = arith.constant 0 : i32
    %c0_i32_1 = arith.constant 0 : i32
    return %arg0, %c0_i32, %c0_i32_0 : i32, i32, i32
  }
}

</mosaic_0001>

<llo_original>
// kernel: tpu_custom_call.1
$region0: #{tpu_custom_call.1}
  #allocation0 [shape = 'u32[]', space=smem, size = 0x4, offset = 0x4, fixed_abs, tag = 'smem constant byte address 0x4 - core index']
  #allocation1 [shape = 'u32[144,128]{1,0:T(1,128)}', space=vmem, size = 0x12000, scoped, tag = 'internal scratch']
  %s0 = inlined_call_operand.hbm [shape: f32[2,8,32], index: 0, kind: input, shape index: {}]
  %s1 = inlined_call_operand.hbm [shape: f32[2,1,8], index: 1, kind: input, shape index: {}]
  %s2 = inlined_call_operand.hbm [shape: bf16[32,96], index: 2, kind: input, shape index: {}]
  %s3 = inlined_call_operand.hbm [shape: f32[1,96], index: 3, kind: input, shape index: {}]
  %s4 = inlined_call_operand.hbm [shape: bf16[32,32], index: 4, kind: input, shape index: {}]
  %s5 = inlined_call_operand.hbm [shape: f32[1,32], index: 5, kind: input, shape index: {}]
  %s6 = inlined_call_operand.hbm [shape: f32[1,32], index: 6, kind: input, shape index: {}]
  %s7 = inlined_call_operand.hbm [shape: f32[1,32], index: 7, kind: input, shape index: {}]
  %s8 = inlined_call_operand.hbm [shape: f32[1,32], index: 8, kind: input, shape index: {}]
  %s9 = inlined_call_operand.hbm [shape: f32[1,32], index: 9, kind: input, shape index: {}]
  %s10 = inlined_call_operand.hbm [shape: bf16[2,8,32], index: 10, kind: output, shape index: {}]
  %s11 = sld [smem:[#allocation0]]
  $region113: #{tpu_custom_call.1} parent=0
    _
  %s13 = ssub.s32 1, %s11
  %s14 = scalar_select 0, %s13, %s11
  $region1: #{tpu_custom_call.1} parent=0
    #allocation2 [shape = 'u8[8192]{0}', space=vmem, size = 0x2000, scoped, tag = 'input window, operand 0']
    #allocation3 [shape = 's32[2]{0}', space=sflag, size = 0x8, scoped, tag = 'scoped memory for tpu_custom_call.1']
    #allocation4 [shape = 's32[2]{0}', space=sflag, size = 0x8, scoped, tag = 'scoped memory for tpu_custom_call.1']
    #allocation5 [shape = 'u8[1024]{0}', space=vmem, size = 0x400, scoped, tag = 'input window, operand 1']
    #allocation6 [shape = 's32[2]{0}', space=sflag, size = 0x8, scoped, tag = 'scoped memory for tpu_custom_call.1']
    #allocation7 [shape = 'u8[8192]{0}', space=vmem, size = 0x2000, scoped, tag = 'input window, operand 2, single buffered']
    #allocation8 [shape = 'u8[512]{0}', space=vmem, size = 0x400, scoped, tag = 'input window, operand 3, single buffered']
    #allocation9 [shape = 's32[1]{0}', space=sflag, size = 0x4, scoped, tag = 'scoped memory for tpu_custom_call.1']
    #allocation10 [shape = 'u8[8192]{0}', space=vmem, size = 0x2000, scoped, tag = 'input window, operand 4, single buffered']
    #allocation11 [shape = 'u8[512]{0}', space=vmem, size = 0x400, scoped, tag = 'input window, operand 5, single buffered']
    #allocation12 [shape = 's32[1]{0}', space=sflag, size = 0x4, scoped, tag = 'scoped memory for tpu_custom_call.1']
    #allocation13 [shape = 'u8[512]{0}', space=vmem, size = 0x400, scoped, tag = 'input window, operand 6, single buffered']
    #allocation14 [shape = 'u8[512]{0}', space=vmem, size = 0x400, scoped, tag = 'input window, operand 7, single buffered']
    #allocation15 [shape = 's32[1]{0}', space=sflag, size = 0x4, scoped, tag = 'scoped memory for tpu_custom_call.1']
    #allocation16 [shape = 'u8[512]{0}', space=vmem, size = 0x400, scoped, tag = 'input window, operand 8, single buffered']
    #allocation17 [shape = 'u8[512]{0}', space=vmem, size = 0x400, scoped, tag = 'input window, operand 9, single buffered']
    #allocation18 [shape = 's32[1]{0}', space=sflag, size = 0x4, scoped, tag = 'scoped memory for tpu_custom_call.1']
    #allocation19 [shape = 'u8[4096]{0}', space=vmem, size = 0x1000, scoped, tag = 'output window, operand 0']
    %15 = vsyncpa [#allocation3], 0
    %s16 = scalar_lea.sflag [#allocation3], 1
    %17 = vsyncpa %s16, 0
    %18 = vsyncpa [#allocation6], 0
    %s19 = scalar_lea.sflag [#allocation6], 1
    %20 = vsyncpa %s19, 0
    %21 = vsyncpa [#allocation9], 0
    %22 = vsyncpa [#allocation12], 0
    %23 = vsyncpa [#allocation15], 0
    %24 = vsyncpa [#allocation18], 0
    %25 = vsyncpa [#allocation4], 0
    %s26 = scalar_lea.sflag [#allocation4], 1
    %27 = vsyncpa %s26, 0
    loop: start=0, step=1, limit=4
    $region2: #{tpu_custom_call.1} parent=1 // loop_pre_header
      _
    $region3: #{tpu_custom_call.1} parent=1 // loop_header
      %s29 = sphi 0, %s33
      %p30 = scmp.ge.s32.totalorder %s29, 4
      %s39 = sphi 0, %s41
      %s42 = sphi 0, %s39
      %s43 = sphi 0, %s42
      %s59 = sphi 0, %s43
      %s65 = sphi 0, %s67
      %s68 = sphi 0, %s65
      %s69 = sphi 0, %s68
      %s85 = sphi 0, %s69
      %s89 = sphi 0, %s89
      %s91 = sphi 0, %s89
      %s92 = sphi 0, %s91
      %s106 = sphi 0, %s92
      %s110 = sphi 0, %s110
      %s112 = sphi 0, %s110
      %s113 = sphi 0, %s112
      %s127 = sphi 0, %s113
      %s131 = sphi 0, %s131
      %s133 = sphi 0, %s131
      %s134 = sphi 0, %s133
      %s148 = sphi 0, %s134
      %s152 = sphi 0, %s152
      %s154 = sphi 0, %s152
      %s155 = sphi 0, %s154
      %s169 = sphi 0, %s155
      %s173 = sphi 0, %s173
      %s175 = sphi 0, %s173
      %s176 = sphi 0, %s175
      %s190 = sphi 0, %s176
      %s194 = sphi 0, %s194
      %s196 = sphi 0, %s194
      %s197 = sphi 0, %s196
      %s211 = sphi 0, %s197
      %s215 = sphi 0, %s215
      %s217 = sphi 0, %s215
      %s218 = sphi 0, %s217
      %s232 = sphi 0, %s218
      %s236 = sphi 0, %s236
      %s238 = sphi 0, %s236
      %s239 = sphi 0, %s238
      %s253 = sphi 0, %s239
      %s259 = sphi 0, %s261
      %s262 = sphi 0, %s259
      %s263 = sphi 0, %s262
      %s279 = sphi 0, %s263
    $region4: #{tpu_custom_call.1} parent=1 // loop_header_branch
      %32 = sbr.rel (%p30) target = $region8
    $region5: #{tpu_custom_call.1} parent=1 // loop_body
      %s34 = ssub.s32 %s29, 1
      %s35 = ssub.s32 %s29, 2
      %s36 = sadd.s32 %s29, 1
      %s37 = ssub.s32 %s29, %s36
      %p38 = scmp.eq.s32.totalorder %s37, 0
      %s40 = sadd.s32 %s39, 1
      %s41 = scalar_select %p38, %s39, %s40
      %p44 = pneg %p38
      %p45 = scmp.eq.s32.totalorder %s29, 1
      %p46 = por %p44, %p45
      %p47 = scmp.ne.s32.totalorder %s39, %s42
      %p48 = scmp.eq.s32.totalorder %s29, 0
      %p49 = por %p47, %p48
      %p50 = scmp.ne.s32.totalorder %s39, %s42
      %p51 = scmp.eq.s32.totalorder %s34, 1
      %p52 = por %p50, %p51
      %p53 = scmp.ne.s32.totalorder %s42, %s43
      %p54 = scmp.eq.s32.totalorder %s34, 0
      %p55 = por %p53, %p54
      %p56 = scmp.ne.s32.totalorder %s42, %s43
      %p57 = scmp.eq.s32.totalorder %s35, 1
      %p58 = por %p56, %p57
      %p60 = scmp.ne.s32.totalorder %s43, %s59
      %p61 = scmp.eq.s32.totalorder %s35, 0
      %p62 = por %p60, %p61
      %s63 = ssub.s32 %s29, %s36
      %p64 = scmp.eq.s32.totalorder %s63, 0
      %s66 = sadd.s32 %s65, 1
      %s67 = scalar_select %p64, %s65, %s66
      %p70 = pneg %p64
      %p71 = scmp.eq.s32.totalorder %s29, 1
      %p72 = por %p70, %p71
      %p73 = scmp.ne.s32.totalorder %s65, %s68
      %p74 = scmp.eq.s32.totalorder %s29, 0
      %p75 = por %p73, %p74
      %p76 = scmp.ne.s32.totalorder %s65, %s68
      %p77 = scmp.eq.s32.totalorder %s34, 1
      %p78 = por %p76, %p77
      %p79 = scmp.ne.s32.totalorder %s68, %s69
      %p80 = scmp.eq.s32.totalorder %s34, 0
      %p81 = por %p79, %p80
      %p82 = scmp.ne.s32.totalorder %s68, %s69
      %p83 = scmp.eq.s32.totalorder %s35, 1
      %p84 = por %p82, %p83
      %p86 = scmp.ne.s32.totalorder %s69, %s85
      %p87 = scmp.eq.s32.totalorder %s35, 0
      %p88 = por %p86, %p87
      %s90 = sadd.s32 %s89, 1
      %p93 = scmp.eq.s32.totalorder %s29, 1
      %p94 = scmp.ne.s32.totalorder %s89, %s91
      %p95 = scmp.eq.s32.totalorder %s29, 0
      %p96 = por %p94, %p95
      %p97 = scmp.ne.s32.totalorder %s89, %s91
      %p98 = scmp.eq.s32.totalorder %s34, 1
      %p99 = por %p97, %p98
      %p100 = scmp.ne.s32.totalorder %s91, %s92
      %p101 = scmp.eq.s32.totalorder %s34, 0
      %p102 = por %p100, %p101
      %p103 = scmp.ne.s32.totalorder %s91, %s92
      %p104 = scmp.eq.s32.totalorder %s35, 1
      %p105 = por %p103, %p104
      %p107 = scmp.ne.s32.totalorder %s92, %s106
      %p108 = scmp.eq.s32.totalorder %s35, 0
      %p109 = por %p107, %p108
      %s111 = sadd.s32 %s110, 1
      %p114 = scmp.eq.s32.totalorder %s29, 1
      %p115 = scmp.ne.s32.totalorder %s110, %s112
      %p116 = scmp.eq.s32.totalorder %s29, 0
      %p117 = por %p115, %p116
      %p118 = scmp.ne.s32.totalorder %s110, %s112
      %p119 = scmp.eq.s32.totalorder %s34, 1
      %p120 = por %p118, %p119
      %p121 = scmp.ne.s32.totalorder %s112, %s113
      %p122 = scmp.eq.s32.totalorder %s34, 0
      %p123 = por %p121, %p122
      %p124 = scmp.ne.s32.totalorder %s112, %s113
      %p125 = scmp.eq.s32.totalorder %s35, 1
      %p126 = por %p124, %p125
      %p128 = scmp.ne.s32.totalorder %s113, %s127
      %p129 = scmp.eq.s32.totalorder %s35, 0
      %p130 = por %p128, %p129
      %s132 = sadd.s32 %s131, 1
      %p135 = scmp.eq.s32.totalorder %s29, 1
      %p136 = scmp.ne.s32.totalorder %s131, %s133
      %p137 = scmp.eq.s32.totalorder %s29, 0
      %p138 = por %p136, %p137
      %p139 = scmp.ne.s32.totalorder %s131, %s133
      %p140 = scmp.eq.s32.totalorder %s34, 1
      %p141 = por %p139, %p140
      %p142 = scmp.ne.s32.totalorder %s133, %s134
      %p143 = scmp.eq.s32.totalorder %s34, 0
      %p144 = por %p142, %p143
      %p145 = scmp.ne.s32.totalorder %s133, %s134
      %p146 = scmp.eq.s32.totalorder %s35, 1
      %p147 = por %p145, %p146
      %p149 = scmp.ne.s32.totalorder %s134, %s148
      %p150 = scmp.eq.s32.totalorder %s35, 0
      %p151 = por %p149, %p150
      %s153 = sadd.s32 %s152, 1
      %p156 = scmp.eq.s32.totalorder %s29, 1
      %p157 = scmp.ne.s32.totalorder %s152, %s154
      %p158 = scmp.eq.s32.totalorder %s29, 0
      %p159 = por %p157, %p158
      %p160 = scmp.ne.s32.totalorder %s152, %s154
      %p161 = scmp.eq.s32.totalorder %s34, 1
      %p162 = por %p160, %p161
      %p163 = scmp.ne.s32.totalorder %s154, %s155
      %p164 = scmp.eq.s32.totalorder %s34, 0
      %p165 = por %p163, %p164
      %p166 = scmp.ne.s32.totalorder %s154, %s155
      %p167 = scmp.eq.s32.totalorder %s35, 1
      %p168 = por %p166, %p167
      %p170 = scmp.ne.s32.totalorder %s155, %s169
      %p171 = scmp.eq.s32.totalorder %s35, 0
      %p172 = por %p170, %p171
      %s174 = sadd.s32 %s173, 1
      %p177 = scmp.eq.s32.totalorder %s29, 1
      %p178 = scmp.ne.s32.totalorder %s173, %s175
      %p179 = scmp.eq.s32.totalorder %s29, 0
      %p180 = por %p178, %p179
      %p181 = scmp.ne.s32.totalorder %s173, %s175
      %p182 = scmp.eq.s32.totalorder %s34, 1
      %p183 = por %p181, %p182
      %p184 = scmp.ne.s32.totalorder %s175, %s176
      %p185 = scmp.eq.s32.totalorder %s34, 0
      %p186 = por %p184, %p185
      %p187 = scmp.ne.s32.totalorder %s175, %s176
      %p188 = scmp.eq.s32.totalorder %s35, 1
      %p189 = por %p187, %p188
      %p191 = scmp.ne.s32.totalorder %s176, %s190
      %p192 = scmp.eq.s32.totalorder %s35, 0
      %p193 = por %p191, %p192
      %s195 = sadd.s32 %s194, 1
      %p198 = scmp.eq.s32.totalorder %s29, 1
      %p199 = scmp.ne.s32.totalorder %s194, %s196
      %p200 = scmp.eq.s32.totalorder %s29, 0
      %p201 = por %p199, %p200
      %p202 = scmp.ne.s32.totalorder %s194, %s196
      %p203 = scmp.eq.s32.totalorder %s34, 1
      %p204 = por %p202, %p203
      %p205 = scmp.ne.s32.totalorder %s196, %s197
      %p206 = scmp.eq.s32.totalorder %s34, 0
      %p207 = por %p205, %p206
      %p208 = scmp.ne.s32.totalorder %s196, %s197
      %p209 = scmp.eq.s32.totalorder %s35, 1
      %p210 = por %p208, %p209
      %p212 = scmp.ne.s32.totalorder %s197, %s211
      %p213 = scmp.eq.s32.totalorder %s35, 0
      %p214 = por %p212, %p213
      %s216 = sadd.s32 %s215, 1
      %p219 = scmp.eq.s32.totalorder %s29, 1
      %p220 = scmp.ne.s32.totalorder %s215, %s217
      %p221 = scmp.eq.s32.totalorder %s29, 0
      %p222 = por %p220, %p221
      %p223 = scmp.ne.s32.totalorder %s215, %s217
      %p224 = scmp.eq.s32.totalorder %s34, 1
      %p225 = por %p223, %p224
      %p226 = scmp.ne.s32.totalorder %s217, %s218
      %p227 = scmp.eq.s32.totalorder %s34, 0
      %p228 = por %p226, %p227
      %p229 = scmp.ne.s32.totalorder %s217, %s218
      %p230 = scmp.eq.s32.totalorder %s35, 1
      %p231 = por %p229, %p230
      %p233 = scmp.ne.s32.totalorder %s218, %s232
      %p234 = scmp.eq.s32.totalorder %s35, 0
      %p235 = por %p233, %p234
      %s237 = sadd.s32 %s236, 1
      %p240 = scmp.eq.s32.totalorder %s29, 1
      %p241 = scmp.ne.s32.totalorder %s236, %s238
      %p242 = scmp.eq.s32.totalorder %s29, 0
      %p243 = por %p241, %p242
      %p244 = scmp.ne.s32.totalorder %s236, %s238
      %p245 = scmp.eq.s32.totalorder %s34, 1
      %p246 = por %p244, %p245
      %p247 = scmp.ne.s32.totalorder %s238, %s239
      %p248 = scmp.eq.s32.totalorder %s34, 0
      %p249 = por %p247, %p248
      %p250 = scmp.ne.s32.totalorder %s238, %s239
      %p251 = scmp.eq.s32.totalorder %s35, 1
      %p252 = por %p250, %p251
      %p254 = scmp.ne.s32.totalorder %s239, %s253
      %p255 = scmp.eq.s32.totalorder %s35, 0
      %p256 = por %p254, %p255
      %s257 = ssub.s32 %s29, %s36
      %p258 = scmp.eq.s32.totalorder %s257, 0
      %s260 = sadd.s32 %s259, 1
      %s261 = scalar_select %p258, %s259, %s260
      %p264 = pneg %p258
      %p265 = scmp.eq.s32.totalorder %s29, 1
      %p266 = por %p264, %p265
      %p267 = scmp.ne.s32.totalorder %s259, %s262
      %p268 = scmp.eq.s32.totalorder %s29, 0
      %p269 = por %p267, %p268
      %p270 = scmp.ne.s32.totalorder %s259, %s262
      %p271 = scmp.eq.s32.totalorder %s34, 1
      %p272 = por %p270, %p271
      %p273 = scmp.ne.s32.totalorder %s262, %s263
      %p274 = scmp.eq.s32.totalorder %s34, 0
      %p275 = por %p273, %p274
      %p276 = scmp.ne.s32.totalorder %s262, %s263
      %p277 = scmp.eq.s32.totalorder %s35, 1
      %p278 = por %p276, %p277
      %p280 = scmp.ne.s32.totalorder %s263, %s279
      %p281 = scmp.eq.s32.totalorder %s35, 0
      %p282 = por %p280, %p281
      %p283 = scmp.le.s32.totalorder 1, %s29
      %p284 = scmp.lt.s32.totalorder %s29, 3
      %p285 = pnand %p283, %p284
      %p286 = pneg %p285
      // Predicated region
      $region9: #{tpu_custom_call.1} parent=5 // pred_check
        _
      $region10: #{tpu_custom_call.1} parent=5 // pred_check_branch
        %288 = sbr.rel (%p285) target = $region12
      $region11: #{tpu_custom_call.1} parent=5 // pred_region
        %s289 = ssub.s32 %s29, 1
        // Predicated region
        $region13: #{tpu_custom_call.1} parent=11 // pred_check
          %p290 = pneg %p102
        $region14: #{tpu_custom_call.1} parent=11 // pred_check_branch
          %292 = sbr.rel (%p290) target = $region16
        $region15: #{tpu_custom_call.1} parent=11 // pred_region
          %s294 = ssub.s32 256, 256
          %295 = vsyncadd [#allocation6], %s294
          %s296 = sshll.u32 [#allocation7], 4
          %s297 = int_to_ptr.vmem [resolvable:$true] %s296
          %302 = dma.hbm_to_vmem [thread:$0]  %s2, 256, %s297, [#allocation6], 64, 64, 4
        $region16: #{tpu_custom_call.1} parent=11 // pred_fallthru
          _
        // Predicated region
        $region17: #{tpu_custom_call.1} parent=11 // pred_check
          %p303 = pneg %p123
        $region18: #{tpu_custom_call.1} parent=11 // pred_check_branch
          %305 = sbr.rel (%p303) target = $region20
        $region19: #{tpu_custom_call.1} parent=11 // pred_region
          %s307 = ssub.s32 16, 16
          %308 = vsyncadd [#allocation9], %s307
          %s310 = sshll.u32 [#allocation8], 4
          %s311 = int_to_ptr.vmem [resolvable:$true] %s310
          %313 = dma.hbm_to_vmem [thread:$0]  %s3, 16, %s311, [#allocation9]
        $region20: #{tpu_custom_call.1} parent=11 // pred_fallthru
          _
        // Predicated region
        $region21: #{tpu_custom_call.1} parent=11 // pred_check
          %p314 = pneg %p144
        $region22: #{tpu_custom_call.1} parent=11 // pred_check_branch
          %316 = sbr.rel (%p314) target = $region24
        $region23: #{tpu_custom_call.1} parent=11 // pred_region
          %s318 = ssub.s32 256, 256
          %319 = vsyncadd [#allocation9], %s318
          %s320 = sshll.u32 [#allocation10], 4
          %s321 = int_to_ptr.vmem [resolvable:$true] %s320
          %326 = dma.hbm_to_vmem [thread:$0]  %s4, 256, %s321, [#allocation9], 64, 64, 4
        $region24: #{tpu_custom_call.1} parent=11 // pred_fallthru
          _
        // Predicated region
        $region25: #{tpu_custom_call.1} parent=11 // pred_check
          %p327 = pneg %p165
        $region26: #{tpu_custom_call.1} parent=11 // pred_check_branch
          %329 = sbr.rel (%p327) target = $region28
        $region27: #{tpu_custom_call.1} parent=11 // pred_region
          %s331 = ssub.s32 16, 16
          %332 = vsyncadd [#allocation12], %s331
          %s334 = sshll.u32 [#allocation11], 4
          %s335 = int_to_ptr.vmem [resolvable:$true] %s334
          %337 = dma.hbm_to_vmem [thread:$0]  %s5, 16, %s335, [#allocation12]
        $region28: #{tpu_custom_call.1} parent=11 // pred_fallthru
          _
        // Predicated region
        $region29: #{tpu_custom_call.1} parent=11 // pred_check
          %p338 = pneg %p186
        $region30: #{tpu_custom_call.1} parent=11 // pred_check_branch
          %340 = sbr.rel (%p338) target = $region32
        $region31: #{tpu_custom_call.1} parent=11 // pred_region
          %s342 = ssub.s32 16, 16
          %343 = vsyncadd [#allocation12], %s342
          %s345 = sshll.u32 [#allocation13], 4
          %s346 = int_to_ptr.vmem [resolvable:$true] %s345
          %348 = dma.hbm_to_vmem [thread:$0]  %s6, 16, %s346, [#allocation12]
        $region32: #{tpu_custom_call.1} parent=11 // pred_fallthru
          _
        // Predicated region
        $region33: #{tpu_custom_call.1} parent=11 // pred_check
          %p349 = pneg %p207
        $region34: #{tpu_custom_call.1} parent=11 // pred_check_branch
          %351 = sbr.rel (%p349) target = $region36
        $region35: #{tpu_custom_call.1} parent=11 // pred_region
          %s353 = ssub.s32 16, 16
          %354 = vsyncadd [#allocation15], %s353
          %s356 = sshll.u32 [#allocation14], 4
          %s357 = int_to_ptr.vmem [resolvable:$true] %s356
          %359 = dma.hbm_to_vmem [thread:$0]  %s7, 16, %s357, [#allocation15]
        $region36: #{tpu_custom_call.1} parent=11 // pred_fallthru
          _
        // Predicated region
        $region37: #{tpu_custom_call.1} parent=11 // pred_check
          %p360 = pneg %p228
        $region38: #{tpu_custom_call.1} parent=11 // pred_check_branch
          %362 = sbr.rel (%p360) target = $region40
        $region39: #{tpu_custom_call.1} parent=11 // pred_region
          %s364 = ssub.s32 16, 16
          %365 = vsyncadd [#allocation15], %s364
          %s367 = sshll.u32 [#allocation16], 4
          %s368 = int_to_ptr.vmem [resolvable:$true] %s367
          %370 = dma.hbm_to_vmem [thread:$0]  %s8, 16, %s368, [#allocation15]
        $region40: #{tpu_custom_call.1} parent=11 // pred_fallthru
          _
        // Predicated region
        $region41: #{tpu_custom_call.1} parent=11 // pred_check
          %p371 = pneg %p249
        $region42: #{tpu_custom_call.1} parent=11 // pred_check_branch
          %373 = sbr.rel (%p371) target = $region44
        $region43: #{tpu_custom_call.1} parent=11 // pred_region
          %s375 = ssub.s32 16, 16
          %376 = vsyncadd [#allocation18], %s375
          %s378 = sshll.u32 [#allocation17], 4
          %s379 = int_to_ptr.vmem [resolvable:$true] %s378
          %381 = dma.hbm_to_vmem [thread:$0]  %s9, 16, %s379, [#allocation18]
        $region44: #{tpu_custom_call.1} parent=11 // pred_fallthru
          _
      $region12: #{tpu_custom_call.1} parent=5 // pred_fallthru
        _
      %p382 = scmp.lt.s32.totalorder %s29, 2
      // Predicated region
      $region45: #{tpu_custom_call.1} parent=5 // pred_check
        %p383 = pneg %p382
      $region46: #{tpu_custom_call.1} parent=5 // pred_check_branch
        %385 = sbr.rel (%p383) target = $region48
      $region47: #{tpu_custom_call.1} parent=5 // pred_region
        // Predicated region
        $region49: #{tpu_custom_call.1} parent=47 // pred_check
          %p386 = pneg %p49
        $region50: #{tpu_custom_call.1} parent=47 // pred_check_branch
          %388 = sbr.rel (%p386) target = $region52
        $region51: #{tpu_custom_call.1} parent=47 // pred_region
          %s389 = sand.u32 %s39, 1
          %s390 = scalar_lea.sflag [#allocation3], %s389
          %s391 = sand.u32 %s39, 1
          %s392 = smul.addr %s391, 8
          %s393 = scalar_lea.vmem [#allocation2], %s392
          %s395 = ssub.s32 128, 128
          %396 = vsyncadd %s390, %s395
          %s397 = smul.addr %s29, 128
          %s398 = scalar_lea.hbm %s0, %s397
          %s400 = sshll.u32 %s393, 4
          %s401 = int_to_ptr.vmem [resolvable:$true] %s400
          %403 = dma.hbm_to_vmem [thread:$0]  %s398, 128, %s401, %s390
        $region52: #{tpu_custom_call.1} parent=47 // pred_fallthru
          _
        // Predicated region
        $region53: #{tpu_custom_call.1} parent=47 // pred_check
          %p404 = pneg %p75
        $region54: #{tpu_custom_call.1} parent=47 // pred_check_branch
          %406 = sbr.rel (%p404) target = $region56
        $region55: #{tpu_custom_call.1} parent=47 // pred_region
          %s407 = sand.u32 %s29, 1
          %s408 = scalar_lea.sflag [#allocation6], %s407
          %s409 = sand.u32 %s65, 1
          %s410 = scalar_lea.vmem [#allocation5], %s409
          %s412 = ssub.s32 16, 16
          %413 = vsyncadd %s408, %s412
          %s414 = smul.addr %s29, 16
          %s415 = scalar_lea.hbm %s1, %s414
          %s417 = sshll.u32 %s410, 4
          %s418 = int_to_ptr.vmem [resolvable:$true] %s417
          %420 = dma.hbm_to_vmem [thread:$0]  %s415, 16, %s418, %s408
        $region56: #{tpu_custom_call.1} parent=47 // pred_fallthru
          _
      $region48: #{tpu_custom_call.1} parent=5 // pred_fallthru
        _
      %p421 = scmp.le.s32.totalorder 1, %s29
      %p422 = scmp.lt.s32.totalorder %s29, 3
      %p423 = pnand %p421, %p422
      %p424 = pneg %p423
      // Predicated region
      $region57: #{tpu_custom_call.1} parent=5 // pred_check
        _
      $region58: #{tpu_custom_call.1} parent=5 // pred_check_branch
        %426 = sbr.rel (%p423) target = $region60
      $region59: #{tpu_custom_call.1} parent=5 // pred_region
        %s427 = ssub.s32 %s29, 1
        %s428 = sand.u32 %s42, 1
        %s429 = scalar_lea.sflag [#allocation3], %s428
        %s430 = sand.u32 %s42, 1
        %s431 = smul.addr %s430, 8
        %s432 = scalar_lea.vmem [#allocation2], %s431
        // Predicated region
        $region61: #{tpu_custom_call.1} parent=59 // pred_check
          %p433 = pneg %p55
        $region62: #{tpu_custom_call.1} parent=59 // pred_check_branch
          %435 = sbr.rel (%p433) target = $region64
        $region63: #{tpu_custom_call.1} parent=59 // pred_region
          %436 = dma.done %s429, 128
        $region64: #{tpu_custom_call.1} parent=59 // pred_fallthru
          _
        %s437 = sand.u32 %s34, 1
        %s438 = scalar_lea.sflag [#allocation6], %s437
        %s439 = sand.u32 %s68, 1
        %s440 = scalar_lea.vmem [#allocation5], %s439
        // Predicated region
        $region65: #{tpu_custom_call.1} parent=59 // pred_check
          %p441 = pneg %p81
        $region66: #{tpu_custom_call.1} parent=59 // pred_check_branch
          %443 = sbr.rel (%p441) target = $region68
        $region67: #{tpu_custom_call.1} parent=59 // pred_region
          %444 = dma.done %s438, 16
        $region68: #{tpu_custom_call.1} parent=59 // pred_fallthru
          _
        // Predicated region
        $region69: #{tpu_custom_call.1} parent=59 // pred_check
          %p445 = pneg %p102
        $region70: #{tpu_custom_call.1} parent=59 // pred_check_branch
          %447 = sbr.rel (%p445) target = $region72
        $region71: #{tpu_custom_call.1} parent=59 // pred_region
          %448 = dma.done [#allocation6], 256
        $region72: #{tpu_custom_call.1} parent=59 // pred_fallthru
          _
        // Predicated region
        $region73: #{tpu_custom_call.1} parent=59 // pred_check
          %p449 = pneg %p123
        $region74: #{tpu_custom_call.1} parent=59 // pred_check_branch
          %451 = sbr.rel (%p449) target = $region76
        $region75: #{tpu_custom_call.1} parent=59 // pred_region
          %452 = dma.done [#allocation9], 16
        $region76: #{tpu_custom_call.1} parent=59 // pred_fallthru
          _
        // Predicated region
        $region77: #{tpu_custom_call.1} parent=59 // pred_check
          %p453 = pneg %p144
        $region78: #{tpu_custom_call.1} parent=59 // pred_check_branch
          %455 = sbr.rel (%p453) target = $region80
        $region79: #{tpu_custom_call.1} parent=59 // pred_region
          %456 = dma.done [#allocation9], 256
        $region80: #{tpu_custom_call.1} parent=59 // pred_fallthru
          _
        // Predicated region
        $region81: #{tpu_custom_call.1} parent=59 // pred_check
          %p457 = pneg %p165
        $region82: #{tpu_custom_call.1} parent=59 // pred_check_branch
          %459 = sbr.rel (%p457) target = $region84
        $region83: #{tpu_custom_call.1} parent=59 // pred_region
          %460 = dma.done [#allocation12], 16
        $region84: #{tpu_custom_call.1} parent=59 // pred_fallthru
          _
        // Predicated region
        $region85: #{tpu_custom_call.1} parent=59 // pred_check
          %p461 = pneg %p186
        $region86: #{tpu_custom_call.1} parent=59 // pred_check_branch
          %463 = sbr.rel (%p461) target = $region88
        $region87: #{tpu_custom_call.1} parent=59 // pred_region
          %464 = dma.done [#allocation12], 16
        $region88: #{tpu_custom_call.1} parent=59 // pred_fallthru
          _
        // Predicated region
        $region89: #{tpu_custom_call.1} parent=59 // pred_check
          %p465 = pneg %p207
        $region90: #{tpu_custom_call.1} parent=59 // pred_check_branch
          %467 = sbr.rel (%p465) target = $region92
        $region91: #{tpu_custom_call.1} parent=59 // pred_region
          %468 = dma.done [#allocation15], 16
        $region92: #{tpu_custom_call.1} parent=59 // pred_fallthru
          _
        // Predicated region
        $region93: #{tpu_custom_call.1} parent=59 // pred_check
          %p469 = pneg %p228
        $region94: #{tpu_custom_call.1} parent=59 // pred_check_branch
          %471 = sbr.rel (%p469) target = $region96
        $region95: #{tpu_custom_call.1} parent=59 // pred_region
          %472 = dma.done [#allocation15], 16
        $region96: #{tpu_custom_call.1} parent=59 // pred_fallthru
          _
        // Predicated region
        $region97: #{tpu_custom_call.1} parent=59 // pred_check
          %p473 = pneg %p249
        $region98: #{tpu_custom_call.1} parent=59 // pred_check_branch
          %475 = sbr.rel (%p473) target = $region100
        $region99: #{tpu_custom_call.1} parent=59 // pred_region
          %476 = dma.done [#allocation18], 16
        $region100: #{tpu_custom_call.1} parent=59 // pred_fallthru
          _
        %s477 = sand.u32 %s42, 1
        %s478 = scalar_lea.sflag [#allocation3], %s477
        %s479 = sand.u32 %s42, 1
        %s480 = smul.addr %s479, 8
        %s481 = scalar_lea.vmem [#allocation2], %s480
        %p482 = pneg %p55
        %p483 = pneg %p52
        %s484 = sand.u32 %s34, 1
        %s485 = scalar_lea.sflag [#allocation6], %s484
        %s486 = sand.u32 %s68, 1
        %s487 = scalar_lea.vmem [#allocation5], %s486
        %p488 = pneg %p81
        %p489 = pneg %p78
        %p490 = pneg %p102
        %p491 = pneg %p99
        %p492 = pneg %p123
        %p493 = pneg %p120
        %p494 = pneg %p144
        %p495 = pneg %p141
        %p496 = pneg %p165
        %p497 = pneg %p162
        %p498 = pneg %p186
        %p499 = pneg %p183
        %p500 = pneg %p207
        %p501 = pneg %p204
        %p502 = pneg %p228
        %p503 = pneg %p225
        %p504 = pneg %p249
        %p505 = pneg %p246
        %p506 = pneg %p275
        %p507 = pneg %p272
        %s508 = sand.u32 %s262, 1
        %s509 = scalar_lea.sflag [#allocation4], %s508
        %s510 = sand.u32 %s262, 1
        %s511 = smul.addr %s510, 4
        %s512 = scalar_lea.vmem [#allocation19], %s511
        %v514 = vld [vmem:[%s432] sm:$0xff]
        %v515 = vld [vmem:[#allocation16] sm:$0x1]
        %v516 = vld [vmem:[#allocation17] sm:$0x1]
        %vm517 = vcmask 261120
        %v518 = vsel %vm517, %v514, 0.0
        %519 = vadd.xlane.f32.xlu0 %v518
        %v520 = vpop.xlane.xlu0 %519
        %v521 = vrcp.pop 32.0
        %v522 = vmul.f32 %v520, %v521
        %v523 = vsub.f32 %v514, %v522
        %v524 = vmul.f32 %v523, %v523
        %v525 = vsel %vm517, %v524, 0.0
        %526 = vadd.xlane.f32.xlu0 %v525
        %v527 = vpop.xlane.xlu0 %526
        %v528 = vmul.f32 %v527, %v521
        %v529 = vadd.f32 %v528, 1e-12
        %v530 = vrsqrt.pop %v529
        %v531 = vmul.f32 %v523, %v530
        %v533 = vlaneseq
        %v534 = vshrl.u32 %v533, 7
        %v535 = vsub.s32 0, %v534
        %v536 = vrot.slane %v515, %v535
        %v538 = vmul.f32 %v531, %v536
        %v540 = vlaneseq
        %v541 = vshrl.u32 %v540, 7
        %v542 = vsub.s32 0, %v541
        %v543 = vrot.slane %v516, %v542
        %v545 = vadd.f32 %v538, %v543
        %v546 = vpack.c.bf16 %v545, %v545
        %v547 = vld [vmem:[#allocation7] sm:$0xf]
        %v548 = vld [vmem:[#allocation7 + $0x4] sm:$0xf]
        %v549 = vld [vmem:[#allocation7 + $0x8] sm:$0xf]
        %v550 = vld [vmem:[#allocation7 + $0xc] sm:$0xf]
        %v555 = vunpack.c.l.b16 %v547
        %v556 = vunpack.c.l.b16 %v548
        %v557 = vunpack.c.l.b16 %v549
        %v558 = vunpack.c.l.b16 %v550
        %v559 = vpack.c.b16 %v556, %v555
        %v560 = vpack.c.b16 %v558, %v557
        %v564 = vsel %vm517, %v546, 0
        %566 = vmatprep.subr.bf16.mxu0 0
        %567 = vmatpush1.bf16.msra.mxu0 %v559
        %568 = vmatprep.subr.bf16.mxu0 0
        %569 = vmatpush1.bf16.msra.mxu0 %v560
        %570 = vmatprep.subr.bf16.mxu0 0
        %571 = vmatpush1.bf16.msra.mxu0 0
        %572 = vmatprep.subr.bf16.mxu0 0
        %573 = vmatpush1.bf16.msra.mxu0 0
        %574 = vmatprep.subr.bf16.mxu0 0
        %575 = vmatpush1.bf16.msra.mxu0 0
        %576 = vmatprep.subr.bf16.mxu0 0
        %577 = vmatpush1.bf16.msra.mxu0 0
        %578 = vmatprep.subr.bf16.mxu0 0
        %579 = vmatpush1.bf16.msra.mxu0 0
        %580 = vmatprep.subr.bf16.mxu0 0
        %581 = vmatpush1.bf16.msra.mxu0 0
        %582 = vmatprep.subr.bf16.mxu0 0
        %583 = vmatpush1.bf16.msra.mxu0 0
        %584 = vmatprep.subr.bf16.mxu0 0
        %585 = vmatpush1.bf16.msra.mxu0 0
        %586 = vmatprep.subr.bf16.mxu0 0
        %587 = vmatpush1.bf16.msra.mxu0 0
        %588 = vmatprep.subr.bf16.mxu0 0
        %589 = vmatpush1.bf16.msra.mxu0 0
        %590 = vmatprep.subr.bf16.mxu0 0
        %591 = vmatpush1.bf16.msra.mxu0 0
        %592 = vmatprep.subr.bf16.mxu0 0
        %593 = vmatpush1.bf16.msra.mxu0 0
        %594 = vmatprep.subr.bf16.mxu0 0
        %595 = vmatpush1.bf16.msra.mxu0 0
        %596 = vmatprep.subr.bf16.mxu0 0
        %597 = vmatpush1.bf16.msra.mxu0 0
        %598 = vmatprep.mubr.bf16.mxu0 0
        %599 = vmatmul.mubr.bf16.gmra.mrb[0].mxu0 %v564
        %v600 = vpop.f32.mrb[0].mxu0
        %v601 = vadd.f32 0.0, %v600
        %v602 = vpop.f32.mrb[0].mxu0
        %v603 = vpop.f32.mrb[0].mxu0
        %v604 = vpop.f32.mrb[0].mxu0
        %605 = vdwg.mxu0
        %v606 = vpack.c.bf16 %v601, %v601
        %v607 = vld [vmem:[#allocation8] sm:$0x1]
        %v608 = vpack.c.bf16 %v607, %v607
        %v610 = vpack.i.b16 %v608, %v608
        %v612 = vlaneseq
        %v613 = vshrl.u32 %v612, 7
        %v614 = vsub.s32 0, %v613
        %v615 = vrot.slane %v610, %v614
        %v616 = vadd.bf16 %v606, %v615
        %v617 = vld [vmem:[%s440] sm:$0x1]
        %v618 = vsub.f32 1.0, %v617
        %v619 = vmul.f32 %v618, -10000.0
        %621 = vrot.lane.b32.xlu0 %v616, 96
        %v622 = vpop.permute.xlu0 %621
        %vm623 = vcmask 64512
        %v625 = vsel %vm623, %v616, 0
        %v628 = vsel %vm623, %v622, 0
        %630 = vmatprep.subr.bf16.mxu0 0
        %631 = vmatpush1.bf16.xpose.msra.mxu0 %v628
        %632 = vmatprep.subr.bf16.mxu0 0
        %633 = vmatpush1.bf16.xpose.msra.mxu0 0
        %634 = vmatprep.subr.bf16.mxu0 0
        %635 = vmatpush1.bf16.xpose.msra.mxu0 0
        %636 = vmatprep.subr.bf16.mxu0 0
        %637 = vmatpush1.bf16.xpose.msra.mxu0 0
        %638 = vmatprep.subr.bf16.mxu0 0
        %639 = vmatpush1.bf16.xpose.msra.mxu0 0
        %640 = vmatprep.subr.bf16.mxu0 0
        %641 = vmatpush1.bf16.xpose.msra.mxu0 0
        %642 = vmatprep.subr.bf16.mxu0 0
        %643 = vmatpush1.bf16.xpose.msra.mxu0 0
        %644 = vmatprep.subr.bf16.mxu0 0
        %645 = vmatpush1.bf16.xpose.msra.mxu0 0
        %646 = vmatprep.subr.bf16.mxu0 0
        %647 = vmatpush1.bf16.xpose.msra.mxu0 0
        %648 = vmatprep.subr.bf16.mxu0 0
        %649 = vmatpush1.bf16.xpose.msra.mxu0 0
        %650 = vmatprep.subr.bf16.mxu0 0
        %651 = vmatpush1.bf16.xpose.msra.mxu0 0
        %652 = vmatprep.subr.bf16.mxu0 0
        %653 = vmatpush1.bf16.xpose.msra.mxu0 0
        %654 = vmatprep.subr.bf16.mxu0 0
        %655 = vmatpush1.bf16.xpose.msra.mxu0 0
        %656 = vmatprep.subr.bf16.mxu0 0
        %657 = vmatpush1.bf16.xpose.msra.mxu0 0
        %658 = vmatprep.subr.bf16.mxu0 0
        %659 = vmatpush1.bf16.xpose.msra.mxu0 0
        %660 = vmatprep.subr.bf16.mxu0 0
        %661 = vmatpush1.bf16.xpose.msra.mxu0 0
        %662 = vmatprep.mubr.bf16.mxu0 0
        %663 = vmatmul.mubr.bf16.gmra.mrb[0].mxu0 %v625
        %v664 = vpop.f32.mrb[0].mxu0
        %v665 = vadd.f32 0.0, %v664
        %v666 = vpop.f32.mrb[0].mxu0
        %v667 = vpop.f32.mrb[0].mxu0
        %v668 = vpop.f32.mrb[0].mxu0
        %669 = vdwg.mxu0
        %v670 = vmul.f32 %v665, 0.35355338
        %v672 = vlaneseq
        %v673 = vshrl.u32 %v672, 7
        %v674 = vsub.s32 0, %v673
        %v675 = vrot.slane %v619, %v674
        %v677 = vadd.f32 %v670, %v675
        %v678 = vsel %vm623, %v677, -inf
        %679 = vmax.xlane.f32.xlu0 %v678
        %v680 = vpop.xlane.xlu0 %679
        %v681 = vsub.f32 %v677, %v680
        %v682 = vmul.f32 %v681, 1.442695
        %v683 = vpow.pop %v682
        %v684 = vsel %vm623, %v683, 0.0
        %685 = vadd.xlane.f32.xlu0 %v684
        %v686 = vpop.xlane.xlu0 %685
        %v687 = vrcp.pop %v686
        %v688 = vmul.f32 %v683, %v687
        %v689 = vpack.c.bf16 %v688, %v688
        %690 = vrot.lane.b32.xlu0 %v616, 64
        %v691 = vpop.permute.xlu0 %690
        %v693 = vsel %vm623, %v689, 0
        %vm695 = vcmask 1043456
        %v697 = vsel %vm695, %v691, 0
        %699 = vmatprep.subr.bf16.mxu0 0
        %700 = vmatpush1.bf16.msra.mxu0 %v697
        %701 = vmatprep.subr.bf16.mxu0 0
        %702 = vmatpush1.bf16.msra.mxu0 0
        %703 = vmatprep.subr.bf16.mxu0 0
        %704 = vmatpush1.bf16.msra.mxu0 0
        %705 = vmatprep.subr.bf16.mxu0 0
        %706 = vmatpush1.bf16.msra.mxu0 0
        %707 = vmatprep.subr.bf16.mxu0 0
        %708 = vmatpush1.bf16.msra.mxu0 0
        %709 = vmatprep.subr.bf16.mxu0 0
        %710 = vmatpush1.bf16.msra.mxu0 0
        %711 = vmatprep.subr.bf16.mxu0 0
        %712 = vmatpush1.bf16.msra.mxu0 0
        %713 = vmatprep.subr.bf16.mxu0 0
        %714 = vmatpush1.bf16.msra.mxu0 0
        %715 = vmatprep.subr.bf16.mxu0 0
        %716 = vmatpush1.bf16.msra.mxu0 0
        %717 = vmatprep.subr.bf16.mxu0 0
        %718 = vmatpush1.bf16.msra.mxu0 0
        %719 = vmatprep.subr.bf16.mxu0 0
        %720 = vmatpush1.bf16.msra.mxu0 0
        %721 = vmatprep.subr.bf16.mxu0 0
        %722 = vmatpush1.bf16.msra.mxu0 0
        %723 = vmatprep.subr.bf16.mxu0 0
        %724 = vmatpush1.bf16.msra.mxu0 0
        %725 = vmatprep.subr.bf16.mxu0 0
        %726 = vmatpush1.bf16.msra.mxu0 0
        %727 = vmatprep.subr.bf16.mxu0 0
        %728 = vmatpush1.bf16.msra.mxu0 0
        %729 = vmatprep.subr.bf16.mxu0 0
        %730 = vmatpush1.bf16.msra.mxu0 0
        %731 = vmatprep.mubr.bf16.mxu0 0
        %732 = vmatmul.mubr.bf16.gmra.mrb[0].mxu0 %v693
        %v733 = vpop.f32.mrb[0].mxu0
        %v734 = vadd.f32 0.0, %v733
        %v735 = vpop.f32.mrb[0].mxu0
        %v736 = vpop.f32.mrb[0].mxu0
        %v737 = vpop.f32.mrb[0].mxu0
        %738 = vdwg.mxu0
        %v739 = vpack.c.bf16 %v734, %v734
        %740 = vrot.lane.b32.xlu0 %v616, 120
        %v741 = vpop.permute.xlu0 %740
        %742 = vrot.lane.b32.xlu0 %v616, 88
        %v743 = vpop.permute.xlu0 %742
        %v745 = vsel %vm623, %v741, 0
        %v748 = vsel %vm623, %v743, 0
        %750 = vmatprep.subr.bf16.mxu0 0
        %751 = vmatpush1.bf16.xpose.msra.mxu0 %v748
        %752 = vmatprep.subr.bf16.mxu0 0
        %753 = vmatpush1.bf16.xpose.msra.mxu0 0
        %754 = vmatprep.subr.bf16.mxu0 0
        %755 = vmatpush1.bf16.xpose.msra.mxu0 0
        %756 = vmatprep.subr.bf16.mxu0 0
        %757 = vmatpush1.bf16.xpose.msra.mxu0 0
        %758 = vmatprep.subr.bf16.mxu0 0
        %759 = vmatpush1.bf16.xpose.msra.mxu0 0
        %760 = vmatprep.subr.bf16.mxu0 0
        %761 = vmatpush1.bf16.xpose.msra.mxu0 0
        %762 = vmatprep.subr.bf16.mxu0 0
        %763 = vmatpush1.bf16.xpose.msra.mxu0 0
        %764 = vmatprep.subr.bf16.mxu0 0
        %765 = vmatpush1.bf16.xpose.msra.mxu0 0
        %766 = vmatprep.subr.bf16.mxu0 0
        %767 = vmatpush1.bf16.xpose.msra.mxu0 0
        %768 = vmatprep.subr.bf16.mxu0 0
        %769 = vmatpush1.bf16.xpose.msra.mxu0 0
        %770 = vmatprep.subr.bf16.mxu0 0
        %771 = vmatpush1.bf16.xpose.msra.mxu0 0
        %772 = vmatprep.subr.bf16.mxu0 0
        %773 = vmatpush1.bf16.xpose.msra.mxu0 0
        %774 = vmatprep.subr.bf16.mxu0 0
        %775 = vmatpush1.bf16.xpose.msra.mxu0 0
        %776 = vmatprep.subr.bf16.mxu0 0
        %777 = vmatpush1.bf16.xpose.msra.mxu0 0
        %778 = vmatprep.subr.bf16.mxu0 0
        %779 = vmatpush1.bf16.xpose.msra.mxu0 0
        %780 = vmatprep.subr.bf16.mxu0 0
        %781 = vmatpush1.bf16.xpose.msra.mxu0 0
        %782 = vmatprep.mubr.bf16.mxu0 0
        %783 = vmatmul.mubr.bf16.gmra.mrb[0].mxu0 %v745
        %v784 = vpop.f32.mrb[0].mxu0
        %v785 = vadd.f32 0.0, %v784
        %v786 = vpop.f32.mrb[0].mxu0
        %v787 = vpop.f32.mrb[0].mxu0
        %v788 = vpop.f32.mrb[0].mxu0
        %789 = vdwg.mxu0
        %v790 = vmul.f32 %v785, 0.35355338
        %v791 = vadd.f32 %v790, %v675
        %v792 = vsel %vm623, %v791, -inf
        %793 = vmax.xlane.f32.xlu0 %v792
        %v794 = vpop.xlane.xlu0 %793
        %v795 = vsub.f32 %v791, %v794
        %v796 = vmul.f32 %v795, 1.442695
        %v797 = vpow.pop %v796
        %v798 = vsel %vm623, %v797, 0.0
        %799 = vadd.xlane.f32.xlu0 %v798
        %v800 = vpop.xlane.xlu0 %799
        %v801 = vrcp.pop %v800
        %v802 = vmul.f32 %v797, %v801
        %v803 = vpack.c.bf16 %v802, %v802
        %804 = vrot.lane.b32.xlu0 %v616, 56
        %v805 = vpop.permute.xlu0 %804
        %v807 = vsel %vm623, %v803, 0
        %v810 = vsel %vm695, %v805, 0
        %812 = vmatprep.subr.bf16.mxu0 0
        %813 = vmatpush1.bf16.msra.mxu0 %v810
        %814 = vmatprep.subr.bf16.mxu0 0
        %815 = vmatpush1.bf16.msra.mxu0 0
        %816 = vmatprep.subr.bf16.mxu0 0
        %817 = vmatpush1.bf16.msra.mxu0 0
        %818 = vmatprep.subr.bf16.mxu0 0
        %819 = vmatpush1.bf16.msra.mxu0 0
        %820 = vmatprep.subr.bf16.mxu0 0
        %821 = vmatpush1.bf16.msra.mxu0 0
        %822 = vmatprep.subr.bf16.mxu0 0
        %823 = vmatpush1.bf16.msra.mxu0 0
        %824 = vmatprep.subr.bf16.mxu0 0
        %825 = vmatpush1.bf16.msra.mxu0 0
        %826 = vmatprep.subr.bf16.mxu0 0
        %827 = vmatpush1.bf16.msra.mxu0 0
        %828 = vmatprep.subr.bf16.mxu0 0
        %829 = vmatpush1.bf16.msra.mxu0 0
        %830 = vmatprep.subr.bf16.mxu0 0
        %831 = vmatpush1.bf16.msra.mxu0 0
        %832 = vmatprep.subr.bf16.mxu0 0
        %833 = vmatpush1.bf16.msra.mxu0 0
        %834 = vmatprep.subr.bf16.mxu0 0
        %835 = vmatpush1.bf16.msra.mxu0 0
        %836 = vmatprep.subr.bf16.mxu0 0
        %837 = vmatpush1.bf16.msra.mxu0 0
        %838 = vmatprep.subr.bf16.mxu0 0
        %839 = vmatpush1.bf16.msra.mxu0 0
        %840 = vmatprep.subr.bf16.mxu0 0
        %841 = vmatpush1.bf16.msra.mxu0 0
        %842 = vmatprep.subr.bf16.mxu0 0
        %843 = vmatpush1.bf16.msra.mxu0 0
        %844 = vmatprep.mubr.bf16.mxu0 0
        %845 = vmatmul.mubr.bf16.gmra.mrb[0].mxu0 %v807
        %v846 = vpop.f32.mrb[0].mxu0
        %v847 = vadd.f32 0.0, %v846
        %v848 = vpop.f32.mrb[0].mxu0
        %v849 = vpop.f32.mrb[0].mxu0
        %v850 = vpop.f32.mrb[0].mxu0
        %851 = vdwg.mxu0
        %v852 = vpack.c.bf16 %v847, %v847
        %853 = vrot.lane.b32.xlu0 %v616, 112
        %v854 = vpop.permute.xlu0 %853
        %855 = vrot.lane.b32.xlu0 %v616, 80
        %v856 = vpop.permute.xlu0 %855
        %v858 = vsel %vm623, %v854, 0
        %v861 = vsel %vm623, %v856, 0
        %863 = vmatprep.subr.bf16.mxu0 0
        %864 = vmatpush1.bf16.xpose.msra.mxu0 %v861
        %865 = vmatprep.subr.bf16.mxu0 0
        %866 = vmatpush1.bf16.xpose.msra.mxu0 0
        %867 = vmatprep.subr.bf16.mxu0 0
        %868 = vmatpush1.bf16.xpose.msra.mxu0 0
        %869 = vmatprep.subr.bf16.mxu0 0
        %870 = vmatpush1.bf16.xpose.msra.mxu0 0
        %871 = vmatprep.subr.bf16.mxu0 0
        %872 = vmatpush1.bf16.xpose.msra.mxu0 0
        %873 = vmatprep.subr.bf16.mxu0 0
        %874 = vmatpush1.bf16.xpose.msra.mxu0 0
        %875 = vmatprep.subr.bf16.mxu0 0
        %876 = vmatpush1.bf16.xpose.msra.mxu0 0
        %877 = vmatprep.subr.bf16.mxu0 0
        %878 = vmatpush1.bf16.xpose.msra.mxu0 0
        %879 = vmatprep.subr.bf16.mxu0 0
        %880 = vmatpush1.bf16.xpose.msra.mxu0 0
        %881 = vmatprep.subr.bf16.mxu0 0
        %882 = vmatpush1.bf16.xpose.msra.mxu0 0
        %883 = vmatprep.subr.bf16.mxu0 0
        %884 = vmatpush1.bf16.xpose.msra.mxu0 0
        %885 = vmatprep.subr.bf16.mxu0 0
        %886 = vmatpush1.bf16.xpose.msra.mxu0 0
        %887 = vmatprep.subr.bf16.mxu0 0
        %888 = vmatpush1.bf16.xpose.msra.mxu0 0
        %889 = vmatprep.subr.bf16.mxu0 0
        %890 = vmatpush1.bf16.xpose.msra.mxu0 0
        %891 = vmatprep.subr.bf16.mxu0 0
        %892 = vmatpush1.bf16.xpose.msra.mxu0 0
        %893 = vmatprep.subr.bf16.mxu0 0
        %894 = vmatpush1.bf16.xpose.msra.mxu0 0
        %895 = vmatprep.mubr.bf16.mxu0 0
        %896 = vmatmul.mubr.bf16.gmra.mrb[0].mxu0 %v858
        %v897 = vpop.f32.mrb[0].mxu0
        %v898 = vadd.f32 0.0, %v897
        %v899 = vpop.f32.mrb[0].mxu0
        %v900 = vpop.f32.mrb[0].mxu0
        %v901 = vpop.f32.mrb[0].mxu0
        %902 = vdwg.mxu0
        %v903 = vmul.f32 %v898, 0.35355338
        %v904 = vadd.f32 %v903, %v675
        %v905 = vsel %vm623, %v904, -inf
        %906 = vmax.xlane.f32.xlu0 %v905
        %v907 = vpop.xlane.xlu0 %906
        %v908 = vsub.f32 %v904, %v907
        %v909 = vmul.f32 %v908, 1.442695
        %v910 = vpow.pop %v909
        %v911 = vsel %vm623, %v910, 0.0
        %912 = vadd.xlane.f32.xlu0 %v911
        %v913 = vpop.xlane.xlu0 %912
        %v914 = vrcp.pop %v913
        %v915 = vmul.f32 %v910, %v914
        %v916 = vpack.c.bf16 %v915, %v915
        %917 = vrot.lane.b32.xlu0 %v616, 48
        %v918 = vpop.permute.xlu0 %917
        %v920 = vsel %vm623, %v916, 0
        %v923 = vsel %vm695, %v918, 0
        %925 = vmatprep.subr.bf16.mxu0 0
        %926 = vmatpush1.bf16.msra.mxu0 %v923
        %927 = vmatprep.subr.bf16.mxu0 0
        %928 = vmatpush1.bf16.msra.mxu0 0
        %929 = vmatprep.subr.bf16.mxu0 0
        %930 = vmatpush1.bf16.msra.mxu0 0
        %931 = vmatprep.subr.bf16.mxu0 0
        %932 = vmatpush1.bf16.msra.mxu0 0
        %933 = vmatprep.subr.bf16.mxu0 0
        %934 = vmatpush1.bf16.msra.mxu0 0
        %935 = vmatprep.subr.bf16.mxu0 0
        %936 = vmatpush1.bf16.msra.mxu0 0
        %937 = vmatprep.subr.bf16.mxu0 0
        %938 = vmatpush1.bf16.msra.mxu0 0
        %939 = vmatprep.subr.bf16.mxu0 0
        %940 = vmatpush1.bf16.msra.mxu0 0
        %941 = vmatprep.subr.bf16.mxu0 0
        %942 = vmatpush1.bf16.msra.mxu0 0
        %943 = vmatprep.subr.bf16.mxu0 0
        %944 = vmatpush1.bf16.msra.mxu0 0
        %945 = vmatprep.subr.bf16.mxu0 0
        %946 = vmatpush1.bf16.msra.mxu0 0
        %947 = vmatprep.subr.bf16.mxu0 0
        %948 = vmatpush1.bf16.msra.mxu0 0
        %949 = vmatprep.subr.bf16.mxu0 0
        %950 = vmatpush1.bf16.msra.mxu0 0
        %951 = vmatprep.subr.bf16.mxu0 0
        %952 = vmatpush1.bf16.msra.mxu0 0
        %953 = vmatprep.subr.bf16.mxu0 0
        %954 = vmatpush1.bf16.msra.mxu0 0
        %955 = vmatprep.subr.bf16.mxu0 0
        %956 = vmatpush1.bf16.msra.mxu0 0
        %957 = vmatprep.mubr.bf16.mxu0 0
        %958 = vmatmul.mubr.bf16.gmra.mrb[0].mxu0 %v920
        %v959 = vpop.f32.mrb[0].mxu0
        %v960 = vadd.f32 0.0, %v959
        %v961 = vpop.f32.mrb[0].mxu0
        %v962 = vpop.f32.mrb[0].mxu0
        %v963 = vpop.f32.mrb[0].mxu0
        %964 = vdwg.mxu0
        %v965 = vpack.c.bf16 %v960, %v960
        %966 = vrot.lane.b32.xlu0 %v616, 104
        %v967 = vpop.permute.xlu0 %966
        %968 = vrot.lane.b32.xlu0 %v616, 72
        %v969 = vpop.permute.xlu0 %968
        %v971 = vsel %vm623, %v967, 0
        %v974 = vsel %vm623, %v969, 0
        %976 = vmatprep.subr.bf16.mxu0 0
        %977 = vmatpush1.bf16.xpose.msra.mxu0 %v974
        %978 = vmatprep.subr.bf16.mxu0 0
        %979 = vmatpush1.bf16.xpose.msra.mxu0 0
        %980 = vmatprep.subr.bf16.mxu0 0
        %981 = vmatpush1.bf16.xpose.msra.mxu0 0
        %982 = vmatprep.subr.bf16.mxu0 0
        %983 = vmatpush1.bf16.xpose.msra.mxu0 0
        %984 = vmatprep.subr.bf16.mxu0 0
        %985 = vmatpush1.bf16.xpose.msra.mxu0 0
        %986 = vmatprep.subr.bf16.mxu0 0
        %987 = vmatpush1.bf16.xpose.msra.mxu0 0
        %988 = vmatprep.subr.bf16.mxu0 0
        %989 = vmatpush1.bf16.xpose.msra.mxu0 0
        %990 = vmatprep.subr.bf16.mxu0 0
        %991 = vmatpush1.bf16.xpose.msra.mxu0 0
        %992 = vmatprep.subr.bf16.mxu0 0
        %993 = vmatpush1.bf16.xpose.msra.mxu0 0
        %994 = vmatprep.subr.bf16.mxu0 0
        %995 = vmatpush1.bf16.xpose.msra.mxu0 0
        %996 = vmatprep.subr.bf16.mxu0 0
        %997 = vmatpush1.bf16.xpose.msra.mxu0 0
        %998 = vmatprep.subr.bf16.mxu0 0
        %999 = vmatpush1.bf16.xpose.msra.mxu0 0
        %1000 = vmatprep.subr.bf16.mxu0 0
        %1001 = vmatpush1.bf16.xpose.msra.mxu0 0
        %1002 = vmatprep.subr.bf16.mxu0 0
        %1003 = vmatpush1.bf16.xpose.msra.mxu0 0
        %1004 = vmatprep.subr.bf16.mxu0 0
        %1005 = vmatpush1.bf16.xpose.msra.mxu0 0
        %1006 = vmatprep.subr.bf16.mxu0 0
        %1007 = vmatpush1.bf16.xpose.msra.mxu0 0
        %1008 = vmatprep.mubr.bf16.mxu0 0
        %1009 = vmatmul.mubr.bf16.gmra.mrb[0].mxu0 %v971
        %v1010 = vpop.f32.mrb[0].mxu0
        %v1011 = vadd.f32 0.0, %v1010
        %v1012 = vpop.f32.mrb[0].mxu0
        %v1013 = vpop.f32.mrb[0].mxu0
        %v1014 = vpop.f32.mrb[0].mxu0
        %1015 = vdwg.mxu0
        %v1016 = vmul.f32 %v1011, 0.35355338
        %v1017 = vadd.f32 %v1016, %v675
        %v1018 = vsel %vm623, %v1017, -inf
        %1019 = vmax.xlane.f32.xlu0 %v1018
        %v1020 = vpop.xlane.xlu0 %1019
        %v1021 = vsub.f32 %v1017, %v1020
        %v1022 = vmul.f32 %v1021, 1.442695
        %v1023 = vpow.pop %v1022
        %v1024 = vsel %vm623, %v1023, 0.0
        %1025 = vadd.xlane.f32.xlu0 %v1024
        %v1026 = vpop.xlane.xlu0 %1025
        %v1027 = vrcp.pop %v1026
        %v1028 = vmul.f32 %v1023, %v1027
        %v1029 = vpack.c.bf16 %v1028, %v1028
        %1030 = vrot.lane.b32.xlu0 %v616, 40
        %v1031 = vpop.permute.xlu0 %1030
        %v1033 = vsel %vm623, %v1029, 0
        %v1036 = vsel %vm695, %v1031, 0
        %1038 = vmatprep.subr.bf16.mxu0 0
        %1039 = vmatpush1.bf16.msra.mxu0 %v1036
        %1040 = vmatprep.subr.bf16.mxu0 0
        %1041 = vmatpush1.bf16.msra.mxu0 0
        %1042 = vmatprep.subr.bf16.mxu0 0
        %1043 = vmatpush1.bf16.msra.mxu0 0
        %1044 = vmatprep.subr.bf16.mxu0 0
        %1045 = vmatpush1.bf16.msra.mxu0 0
        %1046 = vmatprep.subr.bf16.mxu0 0
        %1047 = vmatpush1.bf16.msra.mxu0 0
        %1048 = vmatprep.subr.bf16.mxu0 0
        %1049 = vmatpush1.bf16.msra.mxu0 0
        %1050 = vmatprep.subr.bf16.mxu0 0
        %1051 = vmatpush1.bf16.msra.mxu0 0
        %1052 = vmatprep.subr.bf16.mxu0 0
        %1053 = vmatpush1.bf16.msra.mxu0 0
        %1054 = vmatprep.subr.bf16.mxu0 0
        %1055 = vmatpush1.bf16.msra.mxu0 0
        %1056 = vmatprep.subr.bf16.mxu0 0
        %1057 = vmatpush1.bf16.msra.mxu0 0
        %1058 = vmatprep.subr.bf16.mxu0 0
        %1059 = vmatpush1.bf16.msra.mxu0 0
        %1060 = vmatprep.subr.bf16.mxu0 0
        %1061 = vmatpush1.bf16.msra.mxu0 0
        %1062 = vmatprep.subr.bf16.mxu0 0
        %1063 = vmatpush1.bf16.msra.mxu0 0
        %1064 = vmatprep.subr.bf16.mxu0 0
        %1065 = vmatpush1.bf16.msra.mxu0 0
        %1066 = vmatprep.subr.bf16.mxu0 0
        %1067 = vmatpush1.bf16.msra.mxu0 0
        %1068 = vmatprep.subr.bf16.mxu0 0
        %1069 = vmatpush1.bf16.msra.mxu0 0
        %1070 = vmatprep.mubr.bf16.mxu0 0
        %1071 = vmatmul.mubr.bf16.gmra.mrb[0].mxu0 %v1033
        %v1072 = vpop.f32.mrb[0].mxu0
        %v1073 = vadd.f32 0.0, %v1072
        %v1074 = vpop.f32.mrb[0].mxu0
        %v1075 = vpop.f32.mrb[0].mxu0
        %v1076 = vpop.f32.mrb[0].mxu0
        %1077 = vdwg.mxu0
        %v1078 = vpack.c.bf16 %v1073, %v1073
        %1080 = vrot.lane.b32.xlu0 %v852, 8
        %v1081 = vpop.permute.xlu0 %1080
        %1083 = vrot.lane.b32.xlu0 %v965, 16
        %v1084 = vpop.permute.xlu0 %1083
        %1086 = vrot.lane.b32.xlu0 %v1078, 24
        %v1087 = vpop.permute.xlu0 %1086
        %v1090 = vsel %vm623, %v739, %v1081
        %vm1091 = vcmask 130048
        %v1093 = vsel %vm1091, %v1090, %v1084
        %vm1094 = vcmask 195584
        %v1096 = vsel %vm1094, %v1093, %v1087
        %v1097 = vld [vmem:[#allocation10] sm:$0xf]
        %v1098 = vld [vmem:[#allocation10 + $0x4] sm:$0xf]
        %v1099 = vld [vmem:[#allocation10 + $0x8] sm:$0xf]
        %v1100 = vld [vmem:[#allocation10 + $0xc] sm:$0xf]
        %v1101 = vld [vmem:[#allocation11] sm:$0x1]
        %v1103 = vlaneseq
        %v1104 = vshrl.u32 %v1103, 7
        %v1105 = vsub.s32 0, %v1104
        %v1106 = vrot.slane %v1101, %v1105
        %v1112 = vunpack.c.l.b16 %v1097
        %v1113 = vunpack.c.l.b16 %v1098
        %v1114 = vunpack.c.l.b16 %v1099
        %v1115 = vunpack.c.l.b16 %v1100
        %v1116 = vpack.c.b16 %v1113, %v1112
        %v1117 = vpack.c.b16 %v1115, %v1114
        %v1120 = vsel %vm517, %v1096, 0
        %1122 = vmatprep.subr.bf16.mxu0 0
        %1123 = vmatpush1.bf16.msra.mxu0 %v1116
        %1124 = vmatprep.subr.bf16.mxu0 0
        %1125 = vmatpush1.bf16.msra.mxu0 %v1117
        %1126 = vmatprep.subr.bf16.mxu0 0
        %1127 = vmatpush1.bf16.msra.mxu0 0
        %1128 = vmatprep.subr.bf16.mxu0 0
        %1129 = vmatpush1.bf16.msra.mxu0 0
        %1130 = vmatprep.subr.bf16.mxu0 0
        %1131 = vmatpush1.bf16.msra.mxu0 0
        %1132 = vmatprep.subr.bf16.mxu0 0
        %1133 = vmatpush1.bf16.msra.mxu0 0
        %1134 = vmatprep.subr.bf16.mxu0 0
        %1135 = vmatpush1.bf16.msra.mxu0 0
        %1136 = vmatprep.subr.bf16.mxu0 0
        %1137 = vmatpush1.bf16.msra.mxu0 0
        %1138 = vmatprep.subr.bf16.mxu0 0
        %1139 = vmatpush1.bf16.msra.mxu0 0
        %1140 = vmatprep.subr.bf16.mxu0 0
        %1141 = vmatpush1.bf16.msra.mxu0 0
        %1142 = vmatprep.subr.bf16.mxu0 0
        %1143 = vmatpush1.bf16.msra.mxu0 0
        %1144 = vmatprep.subr.bf16.mxu0 0
        %1145 = vmatpush1.bf16.msra.mxu0 0
        %1146 = vmatprep.subr.bf16.mxu0 0
        %1147 = vmatpush1.bf16.msra.mxu0 0
        %1148 = vmatprep.subr.bf16.mxu0 0
        %1149 = vmatpush1.bf16.msra.mxu0 0
        %1150 = vmatprep.subr.bf16.mxu0 0
        %1151 = vmatpush1.bf16.msra.mxu0 0
        %1152 = vmatprep.subr.bf16.mxu0 0
        %1153 = vmatpush1.bf16.msra.mxu0 0
        %1154 = vmatprep.mubr.bf16.mxu0 0
        %1155 = vmatmul.mubr.bf16.gmra.mrb[0].mxu0 %v1120
        %v1156 = vpop.f32.mrb[0].mxu0
        %v1157 = vadd.f32 %v1106, %v1156
        %v1158 = vpop.f32.mrb[0].mxu0
        %v1159 = vpop.f32.mrb[0].mxu0
        %v1160 = vpop.f32.mrb[0].mxu0
        %1161 = vdwg.mxu0
        %v1162 = vadd.f32 %v1157, %v545
        %v1163 = vld [vmem:[#allocation13] sm:$0x1]
        %v1164 = vld [vmem:[#allocation14] sm:$0x1]
        %v1165 = vsel %vm517, %v1162, 0.0
        %1166 = vadd.xlane.f32.xlu0 %v1165
        %v1167 = vpop.xlane.xlu0 %1166
        %v1168 = vmul.f32 %v1167, %v521
        %v1169 = vsub.f32 %v1162, %v1168
        %v1170 = vmul.f32 %v1169, %v1169
        %v1171 = vsel %vm517, %v1170, 0.0
        %1172 = vadd.xlane.f32.xlu0 %v1171
        %v1173 = vpop.xlane.xlu0 %1172
        %v1174 = vmul.f32 %v1173, %v521
        %v1175 = vadd.f32 %v1174, 1e-12
        %v1176 = vrsqrt.pop %v1175
        %v1177 = vmul.f32 %v1169, %v1176
        %v1179 = vlaneseq
        %v1180 = vshrl.u32 %v1179, 7
        %v1181 = vsub.s32 0, %v1180
        %v1182 = vrot.slane %v1163, %v1181
        %v1184 = vmul.f32 %v1177, %v1182
        %v1186 = vlaneseq
        %v1187 = vshrl.u32 %v1186, 7
        %v1188 = vsub.s32 0, %v1187
        %v1189 = vrot.slane %v1164, %v1188
        %v1191 = vadd.f32 %v1184, %v1189
        %v1192 = vpack.c.bf16 %v1191, %v1191
        %vm1193 = vcmask 257024
        %1194 = vst.msk [vmem:[%s512] sm:$0xf] %vm1193, %v1192
        %s1195 = sand.u32 %s262, 1
        %s1196 = scalar_lea.sflag [#allocation4], %s1195
        %s1197 = sand.u32 %s262, 1
        %s1198 = smul.addr %s1197, 4
        %s1199 = scalar_lea.vmem [#allocation19], %s1198
        // Predicated region
        $region101: #{tpu_custom_call.1} parent=59 // pred_check
          %p1200 = pneg %p272
        $region102: #{tpu_custom_call.1} parent=59 // pred_check_branch
          %1202 = sbr.rel (%p1200) target = $region104
        $region103: #{tpu_custom_call.1} parent=59 // pred_region
          %s1204 = ssub.s32 64, 64
          %1205 = vsyncadd %s1196, %s1204
          %s1206 = smul.addr %s34, 64
          %s1207 = scalar_lea.hbm %s10, %s1206
          %s1209 = sshll.u32 %s1199, 4
          %s1210 = int_to_ptr.vmem [resolvable:$true] %s1209
          %1212 = dma.vmem_to_hbm [thread:$0]  %s1210, 64, %s1207, %s1196
        $region104: #{tpu_custom_call.1} parent=59 // pred_fallthru
          _
      $region60: #{tpu_custom_call.1} parent=5 // pred_fallthru
        _
      %p1213 = scmp.le.s32.totalorder 2, %s29
      // Predicated region
      $region105: #{tpu_custom_call.1} parent=5 // pred_check
        %p1214 = pneg %p1213
      $region106: #{tpu_custom_call.1} parent=5 // pred_check_branch
        %1216 = sbr.rel (%p1214) target = $region108
      $region107: #{tpu_custom_call.1} parent=5 // pred_region
        %s1217 = ssub.s32 %s29, 2
        // Predicated region
        $region109: #{tpu_custom_call.1} parent=107 // pred_check
          %p1218 = pneg %p278
        $region110: #{tpu_custom_call.1} parent=107 // pred_check_branch
          %1220 = sbr.rel (%p1218) target = $region112
        $region111: #{tpu_custom_call.1} parent=107 // pred_region
          %s1221 = sand.u32 %s263, 1
          %s1222 = scalar_lea.sflag [#allocation4], %s1221
          %s1223 = sand.u32 %s263, 1
          %s1224 = smul.addr %s1223, 4
          %s1225 = scalar_lea.vmem [#allocation19], %s1224
          %1226 = dma.done %s1222, 64
        $region112: #{tpu_custom_call.1} parent=107 // pred_fallthru
          _
      $region108: #{tpu_custom_call.1} parent=5 // pred_fallthru
        _
    $region6: #{tpu_custom_call.1} parent=1 // loop_footer
      %s33 = sadd.s32 1, %s29
    $region7: #{tpu_custom_call.1} parent=1 // loop_footer_branch
      %28 = sbr.rel target = $region3
    $region8: #{tpu_custom_call.1} parent=1 // loop_exit
      _
    %1227 = vsyncpa [#allocation3], 1
    %s1228 = scalar_lea.sflag [#allocation3], 1
    %1229 = vsyncpa %s1228, 1
    %1230 = vsyncpa [#allocation6], 1
    %s1231 = scalar_lea.sflag [#allocation6], 1
    %1232 = vsyncpa %s1231, 1
    %1233 = vsyncpa [#allocation9], 1
    %1234 = vsyncpa [#allocation12], 1
    %1235 = vsyncpa [#allocation15], 1
    %1236 = vsyncpa [#allocation18], 1
    %1237 = vsyncpa [#allocation4], 1
    %s1238 = scalar_lea.sflag [#allocation4], 1
    %1239 = vsyncpa %s1238, 1

</llo_original>
